<compile_context>
chip_gen: v7x
topology: tpu7x:2x2x1
jax: 0.10.0
libtpu: 0.0.40
codegen_flags: <defaults>
</compile_context>

<pallas_src>
import functools

import jax
import jax.numpy as jnp
from jax.experimental import pallas as pl
from jax.experimental.pallas import tpu as pltpu


def _layer_norm(h, gamma, beta, eps):
    mu = jnp.mean(h, axis=-1, keepdims=True)
    xc = h - mu
    var = jnp.mean(xc * xc, axis=-1, keepdims=True)
    return xc * jax.lax.rsqrt(var + eps) * gamma + beta


def _encoder_layer_kernel(x_ref, wqkv_ref, bqkv_ref, wo_ref, bo_ref,
                          g1_ref, be1_ref, w1_ref, b1_ref, w2_ref, b2_ref,
                          g2_ref, be2_ref, o_ref, *, d_attention, eps):
    bt, s, e = x_ref.shape
    a = d_attention
    f32 = jnp.float32
    cdt = jnp.bfloat16                      # MXU operand dtype (f32 accumulation)

    x = x_ref[...].astype(f32)              # (Bt, S, E), kept f32 for residuals
    x2d = x.reshape(bt * s, e)

    # ---- fused QKV projection: one wide-N MXU matmul, then static slices ----
    qkv = jnp.dot(x2d.astype(cdt), wqkv_ref[...],
                  preferred_element_type=f32) + bqkv_ref[...]      # (Bt*S, 3A)
    qkv = qkv.reshape(bt, s, 3 * a)
    q = qkv[:, :, 0 * a:1 * a]              # already pre-scaled by 1/sqrt(A)
    k = qkv[:, :, 1 * a:2 * a]
    v = qkv[:, :, 2 * a:3 * a]

    # ---- scores = (Q/sqrt(A)) @ K^T  (contracted einsum, no explicit transpose) ----
    scores = jnp.einsum('bqa,bka->bqk', q, k, preferred_element_type=f32)
    # TODO(synk): optional `mask` argument of forward() not plumbed (mask=None path only).

    # Numerically-stable softmax in f32; reciprocal on the EUP.
    scores = scores - jnp.max(scores, axis=-1, keepdims=True)
    p = jnp.exp(scores)
    attn = p * pl.reciprocal(jnp.sum(p, axis=-1, keepdims=True), approx=True)

    # ---- attention output projection ----
    av = jnp.einsum('bqk,bka->bqa', attn.astype(cdt), v.astype(cdt),
                    preferred_element_type=f32)                    # (Bt, S, A)
    attn_out = jnp.dot(av.reshape(bt * s, a).astype(cdt), wo_ref[...],
                       preferred_element_type=f32) + bo_ref[...]   # (Bt*S, E)

    # ---- residual + LayerNorm1 ----
    # TODO(synk): nn.Dropout treated as identity (inference/eval path).
    h1 = _layer_norm(x2d + attn_out, g1_ref[...], be1_ref[...], eps)

    # ---- feed-forward: Linear -> ReLU -> Linear ----
    y = jnp.dot(h1.astype(cdt), w1_ref[...],
                preferred_element_type=f32) + b1_ref[...]
    y = jnp.maximum(y, 0.0)
    y = jnp.dot(y.astype(cdt), w2_ref[...],
                preferred_element_type=f32) + b2_ref[...]

    # ---- residual + LayerNorm2 ----
    h2 = _layer_norm(h1 + y, g2_ref[...], be2_ref[...], eps)

    o_ref[...] = h2.reshape(bt, s, e).astype(o_ref.dtype)


def simple_encoder_layer(x, params, *, batch_block=None, eps=1e-5):
    """x: (B, S, E) float32. params: dict of transposed weights / biases / LN params."""
    B, S, E = x.shape
    A = params["wq"].shape[1]
    F = params["w1"].shape[1]

    if batch_block is None:
        # Keep >=2 grid steps when possible (v7x megacore), 1 batch elem otherwise.
        batch_block = 1 if B >= 2 else B
    assert B % batch_block == 0

    scale = 1.0 / float(A) ** 0.5
    cdt = jnp.bfloat16

    # Fold the attention scale into wq / bq and fuse QKV weights in the wrapper.
    wqkv = jnp.concatenate(
        [params["wq"] * scale, params["wk"], params["wv"]], axis=1).astype(cdt)
    bqkv = jnp.concatenate(
        [params["bq"] * scale, params["bk"], params["bv"]], axis=1).astype(jnp.float32)
    wo = params["wo"].astype(cdt)
    w1 = params["w1"].astype(cdt)
    w2 = params["w2"].astype(cdt)

    kernel = functools.partial(_encoder_layer_kernel, d_attention=A, eps=eps)

    def inv(shape):  # grid-invariant operand (weights / biases / LN params)
        return pl.BlockSpec(shape, lambda b: (0,) * len(shape))

    nbytes = lambda a: int(a.size) * a.dtype.itemsize
    flops = B * S * (2 * E * 3 * A + 4 * S * A + 2 * A * E + 4 * E * F)
    cost = pl.CostEstimate(
        flops=int(flops),
        transcendentals=int(B * S * (S + 4)),
        bytes_accessed=int(2 * nbytes(x) + nbytes(wqkv) + nbytes(bqkv) + nbytes(wo)
                           + nbytes(w1) + nbytes(w2)
                           + sum(nbytes(params[n]) for n in
                                 ("bo", "b1", "b2", "g1", "be1", "g2", "be2"))))

    return pl.pallas_call(
        kernel,
        out_shape=jax.ShapeDtypeStruct((B, S, E), x.dtype),
        grid_spec=pltpu.PrefetchScalarGridSpec(
            num_scalar_prefetch=0,
            grid=(B // batch_block,),
            in_specs=[
                pl.BlockSpec((batch_block, S, E), lambda b: (b, 0, 0)),  # x
                inv((E, 3 * A)),   # wqkv (bf16, q-scaled)
                inv((1, 3 * A)),   # bqkv
                inv((A, E)),       # wo (bf16)
                inv((1, E)),       # bo
                inv((1, E)),       # gamma1
                inv((1, E)),       # beta1
                inv((E, F)),       # w1 (bf16)
                inv((1, F)),       # b1
                inv((F, E)),       # w2 (bf16)
                inv((1, E)),       # b2
                inv((1, E)),       # gamma2
                inv((1, E)),       # beta2
            ],
            out_specs=pl.BlockSpec((batch_block, S, E), lambda b: (b, 0, 0)),
        ),
        compiler_params=pltpu.CompilerParams(
            dimension_semantics=("parallel",)),
        cost_estimate=cost,
    )(x, wqkv, bqkv, wo, params["bo"], params["g1"], params["be1"],
      w1, params["b1"], w2, params["b2"], params["g2"], params["be2"])


def _init_params(key, d_embedding, d_attention, dim_feedforward):
    """Deterministic synthetic init matching nn.Linear / nn.LayerNorm shapes.

    PyTorch nn.Linear(in, out) has weight (out, in), bias (out,). We store
    weights transposed to (in, out) and biases as (1, out). LayerNorm uses the
    PyTorch default init (gamma=1, beta=0)."""
    keys = jax.random.split(key, 12)

    def lin(kw, kb, fan_in, fan_out):
        bound = 1.0 / (fan_in ** 0.5)
        w = jax.random.uniform(kw, (fan_in, fan_out), jnp.float32, -bound, bound)
        b = jax.random.uniform(kb, (1, fan_out), jnp.float32, -bound, bound)
        return w, b

    wq, bq = lin(keys[0], keys[1], d_embedding, d_attention)
    wk, bk = lin(keys[2], keys[3], d_embedding, d_attention)
    wv, bv = lin(keys[4], keys[5], d_embedding, d_attention)
    wo, bo = lin(keys[6], keys[7], d_attention, d_embedding)
    w1, b1 = lin(keys[8], keys[9], d_embedding, dim_feedforward)
    w2, b2 = lin(keys[10], keys[11], dim_feedforward, d_embedding)
    ones = jnp.ones((1, d_embedding), jnp.float32)
    zeros = jnp.zeros((1, d_embedding), jnp.float32)
    return dict(wq=wq, bq=bq, wk=wk, bk=bk, wv=wv, bv=bv, wo=wo, bo=bo,
                w1=w1, b1=b1, w2=w2, b2=b2,
                g1=ones, be1=zeros, g2=ones, be2=zeros)


def _reference(x, p, eps=1e-5):
    """Pure-JAX f32 reference of the PyTorch SimpleEncoderLayer forward
    (mask=None, dropout in eval mode)."""
    q = x @ p["wq"] + p["bq"]
    k = x @ p["wk"] + p["bk"]
    v = x @ p["wv"] + p["bv"]
    scores = jnp.einsum('bqa,bka->bqk', q, k) / jnp.sqrt(jnp.float32(q.shape[-1]))
    attn = jax.nn.softmax(scores, axis=-1)
    attn_out = jnp.einsum('bqk,bka->bqa', attn, v) @ p["wo"] + p["bo"]

    def ln(h, g, b):
        mu = jnp.mean(h, axis=-1, keepdims=True)
        var = jnp.mean((h - mu) ** 2, axis=-1, keepdims=True)
        return (h - mu) * jax.lax.rsqrt(var + eps) * g + b

    h1 = ln(x + attn_out, p["g1"], p["be1"])
    y = jnp.maximum(h1 @ p["w1"] + p["b1"], 0.0)
    y = y @ p["w2"] + p["b2"]
    return ln(h1 + y, p["g2"], p["be2"])


if __name__ == "__main__":
    B, S = 2, 8
    d_embedding, d_attention, dim_feedforward = 32, 16, 512

    key = jax.random.PRNGKey(0)
    kx, kp = jax.random.split(key)
    x = jax.random.normal(kx, (B, S, d_embedding), jnp.float32)
    params = _init_params(kp, d_embedding, d_attention, dim_feedforward)

    out = jax.block_until_ready(simple_encoder_layer(x, params))
    ref = _reference(x, params)

    assert out.shape == (B, S, d_embedding)
    # bf16 MXU operands + approx reciprocal => loosened tolerance vs f32 reference.
    assert jnp.allclose(out, ref, atol=3e-2, rtol=3e-2), \
        float(jnp.max(jnp.abs(out - ref)))

    print("KERNEL_OK")
</pallas_src>

<mosaic_0001>
module attributes {stable_mosaic.version = 11 : i64} {
  func.func @_encoder_layer_kernel(%arg0: i32, %arg1: memref<1x8x32xf32, #tpu.memory_space<vmem>>, %arg2: memref<32x48xbf16, #tpu.memory_space<vmem>>, %arg3: memref<1x48xf32, #tpu.memory_space<vmem>>, %arg4: memref<16x32xbf16, #tpu.memory_space<vmem>>, %arg5: memref<1x32xf32, #tpu.memory_space<vmem>>, %arg6: memref<1x32xf32, #tpu.memory_space<vmem>>, %arg7: memref<1x32xf32, #tpu.memory_space<vmem>>, %arg8: memref<32x512xbf16, #tpu.memory_space<vmem>>, %arg9: memref<1x512xf32, #tpu.memory_space<vmem>>, %arg10: memref<512x32xbf16, #tpu.memory_space<vmem>>, %arg11: memref<1x32xf32, #tpu.memory_space<vmem>>, %arg12: memref<1x32xf32, #tpu.memory_space<vmem>>, %arg13: memref<1x32xf32, #tpu.memory_space<vmem>>, %arg14: memref<1x8x32xf32, #tpu.memory_space<vmem>>) attributes {dimension_semantics = [#tpu.dimension_semantics<parallel>], iteration_bounds = array<i64: 2>, scalar_prefetch = 0 : i64, scratch_operands = 0 : i64, tpu.core_type = #tpu.core_type<tc>, window_params = [{transform_indices = @transform_0, window_bounds = array<i64: 1, 8, 32>}, {pipeline_mode = #tpu.pipeline_mode<synchronous>, transform_indices = @transform_1, window_bounds = array<i64: 32, 48>}, {pipeline_mode = #tpu.pipeline_mode<synchronous>, transform_indices = @transform_2, window_bounds = array<i64: 1, 48>}, {pipeline_mode = #tpu.pipeline_mode<synchronous>, transform_indices = @transform_3, window_bounds = array<i64: 16, 32>}, {pipeline_mode = #tpu.pipeline_mode<synchronous>, transform_indices = @transform_4, window_bounds = array<i64: 1, 32>}, {pipeline_mode = #tpu.pipeline_mode<synchronous>, transform_indices = @transform_5, window_bounds = array<i64: 1, 32>}, {pipeline_mode = #tpu.pipeline_mode<synchronous>, transform_indices = @transform_6, window_bounds = array<i64: 1, 32>}, {pipeline_mode = #tpu.pipeline_mode<synchronous>, transform_indices = @transform_7, window_bounds = array<i64: 32, 512>}, {pipeline_mode = #tpu.pipeline_mode<synchronous>, transform_indices = @transform_8, window_bounds = array<i64: 1, 512>}, {pipeline_mode = #tpu.pipeline_mode<synchronous>, transform_indices = @transform_9, window_bounds = array<i64: 512, 32>}, {pipeline_mode = #tpu.pipeline_mode<synchronous>, transform_indices = @transform_10, window_bounds = array<i64: 1, 32>}, {pipeline_mode = #tpu.pipeline_mode<synchronous>, transform_indices = @transform_11, window_bounds = array<i64: 1, 32>}, {pipeline_mode = #tpu.pipeline_mode<synchronous>, transform_indices = @transform_12, window_bounds = array<i64: 1, 32>}, {transform_indices = @transform_13, window_bounds = array<i64: 1, 8, 32>}]} {
    %c0 = arith.constant 0 : index
    %c0_0 = arith.constant 0 : index
    %c0_1 = arith.constant 0 : index
    %0 = vector.load %arg1[%c0, %c0_0, %c0_1] : memref<1x8x32xf32, #tpu.memory_space<vmem>>, vector<1x8x32xf32>
    %1 = vector.shape_cast %0 : vector<1x8x32xf32> to vector<8x32xf32>
    %2 = arith.truncf %1 : vector<8x32xf32> to vector<8x32xbf16>
    %c0_2 = arith.constant 0 : index
    %c0_3 = arith.constant 0 : index
    %3 = vector.load %arg2[%c0_2, %c0_3] : memref<32x48xbf16, #tpu.memory_space<vmem>>, vector<32x48xbf16>
    %cst = arith.constant dense<0.000000e+00> : vector<8x48xf32>
    %4 = tpu.matmul %2, %3, %cst {dimension_numbers = #tpu.dot_dimension_numbers<[1], [0], [0], [1], [0, 0, 1, 1], [], []>} : vector<8x32xbf16>, vector<32x48xbf16>, vector<8x48xf32> -> vector<8x48xf32>
    %c0_4 = arith.constant 0 : index
    %c0_5 = arith.constant 0 : index
    %5 = vector.load %arg3[%c0_4, %c0_5] : memref<1x48xf32, #tpu.memory_space<vmem>>, vector<1x48xf32>
    %6 = vector.broadcast %5 : vector<1x48xf32> to vector<8x48xf32>
    %7 = arith.addf %4, %6 : vector<8x48xf32>
    %8 = vector.shape_cast %7 : vector<8x48xf32> to vector<1x8x48xf32>
    %9 = vector.extract_strided_slice %8 {offsets = [0, 0, 0], sizes = [1, 8, 16], strides = [1, 1, 1]} : vector<1x8x48xf32> to vector<1x8x16xf32>
    %10 = vector.extract_strided_slice %8 {offsets = [0, 0, 16], sizes = [1, 8, 16], strides = [1, 1, 1]} : vector<1x8x48xf32> to vector<1x8x16xf32>
    %11 = vector.extract_strided_slice %8 {offsets = [0, 0, 32], sizes = [1, 8, 16], strides = [1, 1, 1]} : vector<1x8x48xf32> to vector<1x8x16xf32>
    "tpu.trace_start"() <{level = 10 : i32, message = "bqa,bka->bqk"}> : () -> ()
    %cst_6 = arith.constant dense<0.000000e+00> : vector<1x8x8xf32>
    %12 = tpu.matmul %9, %10, %cst_6 {dimension_numbers = #tpu.dot_dimension_numbers<[2], [2], [1], [1], [0, 0, 0, 1, 1, 1], [0], [0]>} : vector<1x8x16xf32>, vector<1x8x16xf32>, vector<1x8x8xf32> -> vector<1x8x8xf32>
    "tpu.trace_stop"() : () -> ()
    %cst_7 = arith.constant dense<0xFF800000> : vector<1x8xf32>
    %13 = vector.multi_reduction <maximumf>, %12, %cst_7 [2] : vector<1x8x8xf32> to vector<1x8xf32>
    %14 = vector.shape_cast %13 : vector<1x8xf32> to vector<1x8x1xf32>
    %15 = vector.broadcast %14 : vector<1x8x1xf32> to vector<1x8x8xf32>
    %16 = arith.subf %12, %15 : vector<1x8x8xf32>
    %17 = math.exp %16 : vector<1x8x8xf32>
    %cst_8 = arith.constant dense<0.000000e+00> : vector<1x8xf32>
    %18 = vector.multi_reduction <add>, %17, %cst_8 [2] : vector<1x8x8xf32> to vector<1x8xf32>
    %19 = vector.shape_cast %18 : vector<1x8xf32> to vector<1x8x1xf32>
    %20 = tpu.reciprocal %19 {approx = true} : vector<1x8x1xf32> -> vector<1x8x1xf32>
    %21 = vector.broadcast %20 : vector<1x8x1xf32> to vector<1x8x8xf32>
    %22 = arith.mulf %17, %21 : vector<1x8x8xf32>
    %23 = arith.truncf %22 : vector<1x8x8xf32> to vector<1x8x8xbf16>
    %24 = arith.truncf %11 : vector<1x8x16xf32> to vector<1x8x16xbf16>
    "tpu.trace_start"() <{level = 10 : i32, message = "bqk,bka->bqa"}> : () -> ()
    %cst_9 = arith.constant dense<0.000000e+00> : vector<1x8x16xf32>
    %25 = tpu.matmul %23, %24, %cst_9 {dimension_numbers = #tpu.dot_dimension_numbers<[2], [1], [1], [2], [0, 0, 0, 1, 1, 2], [0], [0]>} : vector<1x8x8xbf16>, vector<1x8x16xbf16>, vector<1x8x16xf32> -> vector<1x8x16xf32>
    "tpu.trace_stop"() : () -> ()
    %26 = vector.shape_cast %25 : vector<1x8x16xf32> to vector<8x16xf32>
    %27 = arith.truncf %26 : vector<8x16xf32> to vector<8x16xbf16>
    %c0_10 = arith.constant 0 : index
    %c0_11 = arith.constant 0 : index
    %28 = vector.load %arg4[%c0_10, %c0_11] : memref<16x32xbf16, #tpu.memory_space<vmem>>, vector<16x32xbf16>
    %cst_12 = arith.constant dense<0.000000e+00> : vector<8x32xf32>
    %29 = tpu.matmul %27, %28, %cst_12 {dimension_numbers = #tpu.dot_dimension_numbers<[1], [0], [0], [1], [0, 0, 1, 1], [], []>} : vector<8x16xbf16>, vector<16x32xbf16>, vector<8x32xf32> -> vector<8x32xf32>
    %c0_13 = arith.constant 0 : index
    %c0_14 = arith.constant 0 : index
    %30 = vector.load %arg5[%c0_13, %c0_14] : memref<1x32xf32, #tpu.memory_space<vmem>>, vector<1x32xf32>
    %31 = vector.broadcast %30 : vector<1x32xf32> to vector<8x32xf32>
    %32 = arith.addf %29, %31 : vector<8x32xf32>
    %33 = arith.addf %1, %32 : vector<8x32xf32>
    %c0_15 = arith.constant 0 : index
    %c0_16 = arith.constant 0 : index
    %34 = vector.load %arg6[%c0_15, %c0_16] : memref<1x32xf32, #tpu.memory_space<vmem>>, vector<1x32xf32>
    %c0_17 = arith.constant 0 : index
    %c0_18 = arith.constant 0 : index
    %35 = vector.load %arg7[%c0_17, %c0_18] : memref<1x32xf32, #tpu.memory_space<vmem>>, vector<1x32xf32>
    %cst_19 = arith.constant dense<0.000000e+00> : vector<8xf32>
    %36 = vector.multi_reduction <add>, %33, %cst_19 [1] : vector<8x32xf32> to vector<8xf32>
    %37 = vector.shape_cast %36 : vector<8xf32> to vector<8x1xf32>
    %cst_20 = arith.constant 3.200000e+01 : f32
    %38 = vector.broadcast %cst_20 : f32 to vector<8x1xf32>
    %39 = arith.divf %37, %38 : vector<8x1xf32>
    %40 = vector.broadcast %39 : vector<8x1xf32> to vector<8x32xf32>
    %41 = arith.subf %33, %40 : vector<8x32xf32>
    %42 = arith.mulf %41, %41 : vector<8x32xf32>
    %cst_21 = arith.constant dense<0.000000e+00> : vector<8xf32>
    %43 = vector.multi_reduction <add>, %42, %cst_21 [1] : vector<8x32xf32> to vector<8xf32>
    %44 = vector.shape_cast %43 : vector<8xf32> to vector<8x1xf32>
    %cst_22 = arith.constant 3.200000e+01 : f32
    %45 = vector.broadcast %cst_22 : f32 to vector<8x1xf32>
    %46 = arith.divf %44, %45 : vector<8x1xf32>
    %cst_23 = arith.constant 9.99999974E-6 : f32
    %47 = vector.broadcast %cst_23 : f32 to vector<8x1xf32>
    %48 = arith.addf %46, %47 : vector<8x1xf32>
    %49 = math.rsqrt %48 : vector<8x1xf32>
    %50 = vector.broadcast %49 : vector<8x1xf32> to vector<8x32xf32>
    %51 = arith.mulf %41, %50 : vector<8x32xf32>
    %52 = vector.broadcast %34 : vector<1x32xf32> to vector<8x32xf32>
    %53 = arith.mulf %51, %52 : vector<8x32xf32>
    %54 = vector.broadcast %35 : vector<1x32xf32> to vector<8x32xf32>
    %55 = arith.addf %53, %54 : vector<8x32xf32>
    %56 = arith.truncf %55 : vector<8x32xf32> to vector<8x32xbf16>
    %c0_24 = arith.constant 0 : index
    %c0_25 = arith.constant 0 : index
    %57 = vector.load %arg8[%c0_24, %c0_25] : memref<32x512xbf16, #tpu.memory_space<vmem>>, vector<32x512xbf16>
    %cst_26 = arith.constant dense<0.000000e+00> : vector<8x512xf32>
    %58 = tpu.matmul %56, %57, %cst_26 {dimension_numbers = #tpu.dot_dimension_numbers<[1], [0], [0], [1], [0, 0, 1, 1], [], []>} : vector<8x32xbf16>, vector<32x512xbf16>, vector<8x512xf32> -> vector<8x512xf32>
    %c0_27 = arith.constant 0 : index
    %c0_28 = arith.constant 0 : index
    %59 = vector.load %arg9[%c0_27, %c0_28] : memref<1x512xf32, #tpu.memory_space<vmem>>, vector<1x512xf32>
    %60 = vector.broadcast %59 : vector<1x512xf32> to vector<8x512xf32>
    %61 = arith.addf %58, %60 : vector<8x512xf32>
    %cst_29 = arith.constant 0.000000e+00 : f32
    %62 = vector.broadcast %cst_29 : f32 to vector<8x512xf32>
    %63 = arith.maximumf %61, %62 : vector<8x512xf32>
    %64 = arith.truncf %63 : vector<8x512xf32> to vector<8x512xbf16>
    %c0_30 = arith.constant 0 : index
    %c0_31 = arith.constant 0 : index
    %65 = vector.load %arg10[%c0_30, %c0_31] : memref<512x32xbf16, #tpu.memory_space<vmem>>, vector<512x32xbf16>
    %cst_32 = arith.constant dense<0.000000e+00> : vector<8x32xf32>
    %66 = tpu.matmul %64, %65, %cst_32 {dimension_numbers = #tpu.dot_dimension_numbers<[1], [0], [0], [1], [0, 0, 1, 1], [], []>} : vector<8x512xbf16>, vector<512x32xbf16>, vector<8x32xf32> -> vector<8x32xf32>
    %c0_33 = arith.constant 0 : index
    %c0_34 = arith.constant 0 : index
    %67 = vector.load %arg11[%c0_33, %c0_34] : memref<1x32xf32, #tpu.memory_space<vmem>>, vector<1x32xf32>
    %68 = vector.broadcast %67 : vector<1x32xf32> to vector<8x32xf32>
    %69 = arith.addf %66, %68 : vector<8x32xf32>
    %70 = arith.addf %55, %69 : vector<8x32xf32>
    %c0_35 = arith.constant 0 : index
    %c0_36 = arith.constant 0 : index
    %71 = vector.load %arg12[%c0_35, %c0_36] : memref<1x32xf32, #tpu.memory_space<vmem>>, vector<1x32xf32>
    %c0_37 = arith.constant 0 : index
    %c0_38 = arith.constant 0 : index
    %72 = vector.load %arg13[%c0_37, %c0_38] : memref<1x32xf32, #tpu.memory_space<vmem>>, vector<1x32xf32>
    %cst_39 = arith.constant dense<0.000000e+00> : vector<8xf32>
    %73 = vector.multi_reduction <add>, %70, %cst_39 [1] : vector<8x32xf32> to vector<8xf32>
    %74 = vector.shape_cast %73 : vector<8xf32> to vector<8x1xf32>
    %cst_40 = arith.constant 3.200000e+01 : f32
    %75 = vector.broadcast %cst_40 : f32 to vector<8x1xf32>
    %76 = arith.divf %74, %75 : vector<8x1xf32>
    %77 = vector.broadcast %76 : vector<8x1xf32> to vector<8x32xf32>
    %78 = arith.subf %70, %77 : vector<8x32xf32>
    %79 = arith.mulf %78, %78 : vector<8x32xf32>
    %cst_41 = arith.constant dense<0.000000e+00> : vector<8xf32>
    %80 = vector.multi_reduction <add>, %79, %cst_41 [1] : vector<8x32xf32> to vector<8xf32>
    %81 = vector.shape_cast %80 : vector<8xf32> to vector<8x1xf32>
    %cst_42 = arith.constant 3.200000e+01 : f32
    %82 = vector.broadcast %cst_42 : f32 to vector<8x1xf32>
    %83 = arith.divf %81, %82 : vector<8x1xf32>
    %cst_43 = arith.constant 9.99999974E-6 : f32
    %84 = vector.broadcast %cst_43 : f32 to vector<8x1xf32>
    %85 = arith.addf %83, %84 : vector<8x1xf32>
    %86 = math.rsqrt %85 : vector<8x1xf32>
    %87 = vector.broadcast %86 : vector<8x1xf32> to vector<8x32xf32>
    %88 = arith.mulf %78, %87 : vector<8x32xf32>
    %89 = vector.broadcast %71 : vector<1x32xf32> to vector<8x32xf32>
    %90 = arith.mulf %88, %89 : vector<8x32xf32>
    %91 = vector.broadcast %72 : vector<1x32xf32> to vector<8x32xf32>
    %92 = arith.addf %90, %91 : vector<8x32xf32>
    %93 = vector.shape_cast %92 : vector<8x32xf32> to vector<1x8x32xf32>
    %c0_44 = arith.constant 0 : index
    %c0_45 = arith.constant 0 : index
    %c0_46 = arith.constant 0 : index
    %94 = vector.load %arg14[%c0_44, %c0_45, %c0_46] : memref<1x8x32xf32, #tpu.memory_space<vmem>>, vector<1x8x32xf32>
    tpu.vector_store %arg14[%c0_44, %c0_45, %c0_46], %93 {strides = array<i32>} : memref<1x8x32xf32, #tpu.memory_space<vmem>>, vector<1x8x32xf32>,
    return
  }
  func.func @transform_0(%arg0: i32) -> (i32, i32, i32) {
    %c0_i32 = arith.constant 0 : i32
    %c0_i32_0 = arith.constant 0 : i32
    %c0_i32_1 = arith.constant 0 : i32
    return %arg0, %c0_i32, %c0_i32_0 : i32, i32, i32
  }
  func.func @transform_1(%arg0: i32) -> (i32, i32) {
    %c0_i32 = arith.constant 0 : i32
    %c0_i32_0 = arith.constant 0 : i32
    %c0_i32_1 = arith.constant 0 : i32
    return %c0_i32, %c0_i32_0 : i32, i32
  }
  func.func @transform_2(%arg0: i32) -> (i32, i32) {
    %c0_i32 = arith.constant 0 : i32
    %c0_i32_0 = arith.constant 0 : i32
    %c0_i32_1 = arith.constant 0 : i32
    return %c0_i32, %c0_i32_0 : i32, i32
  }
  func.func @transform_3(%arg0: i32) -> (i32, i32) {
    %c0_i32 = arith.constant 0 : i32
    %c0_i32_0 = arith.constant 0 : i32
    %c0_i32_1 = arith.constant 0 : i32
    return %c0_i32, %c0_i32_0 : i32, i32
  }
  func.func @transform_4(%arg0: i32) -> (i32, i32) {
    %c0_i32 = arith.constant 0 : i32
    %c0_i32_0 = arith.constant 0 : i32
    %c0_i32_1 = arith.constant 0 : i32
    return %c0_i32, %c0_i32_0 : i32, i32
  }
  func.func @transform_5(%arg0: i32) -> (i32, i32) {
    %c0_i32 = arith.constant 0 : i32
    %c0_i32_0 = arith.constant 0 : i32
    %c0_i32_1 = arith.constant 0 : i32
    return %c0_i32, %c0_i32_0 : i32, i32
  }
  func.func @transform_6(%arg0: i32) -> (i32, i32) {
    %c0_i32 = arith.constant 0 : i32
    %c0_i32_0 = arith.constant 0 : i32
    %c0_i32_1 = arith.constant 0 : i32
    return %c0_i32, %c0_i32_0 : i32, i32
  }
  func.func @transform_7(%arg0: i32) -> (i32, i32) {
    %c0_i32 = arith.constant 0 : i32
    %c0_i32_0 = arith.constant 0 : i32
    %c0_i32_1 = arith.constant 0 : i32
    return %c0_i32, %c0_i32_0 : i32, i32
  }
  func.func @transform_8(%arg0: i32) -> (i32, i32) {
    %c0_i32 = arith.constant 0 : i32
    %c0_i32_0 = arith.constant 0 : i32
    %c0_i32_1 = arith.constant 0 : i32
    return %c0_i32, %c0_i32_0 : i32, i32
  }
  func.func @transform_9(%arg0: i32) -> (i32, i32) {
    %c0_i32 = arith.constant 0 : i32
    %c0_i32_0 = arith.constant 0 : i32
    %c0_i32_1 = arith.constant 0 : i32
    return %c0_i32, %c0_i32_0 : i32, i32
  }
  func.func @transform_10(%arg0: i32) -> (i32, i32) {
    %c0_i32 = arith.constant 0 : i32
    %c0_i32_0 = arith.constant 0 : i32
    %c0_i32_1 = arith.constant 0 : i32
    return %c0_i32, %c0_i32_0 : i32, i32
  }
  func.func @transform_11(%arg0: i32) -> (i32, i32) {
    %c0_i32 = arith.constant 0 : i32
    %c0_i32_0 = arith.constant 0 : i32
    %c0_i32_1 = arith.constant 0 : i32
    return %c0_i32, %c0_i32_0 : i32, i32
  }
  func.func @transform_12(%arg0: i32) -> (i32, i32) {
    %c0_i32 = arith.constant 0 : i32
    %c0_i32_0 = arith.constant 0 : i32
    %c0_i32_1 = arith.constant 0 : i32
    return %c0_i32, %c0_i32_0 : i32, i32
  }
  func.func @transform_13(%arg0: i32) -> (i32, i32, i32) {
    %c0_i32 = arith.constant 0 : i32
    %c0_i32_0 = arith.constant 0 : i32
    %c0_i32_1 = arith.constant 0 : i32
    return %arg0, %c0_i32, %c0_i32_0 : i32, i32, i32
  }
}

</mosaic_0001>

<llo_original>
// kernel: tpu_custom_call.1
$region0: #{tpu_custom_call.1}
  #allocation0 [shape = 'u32[]', space=smem, size = 0x4, offset = 0x4, fixed_abs, tag = 'smem constant byte address 0x4 - core index']
  #allocation1 [shape = 'u32[144,128]{1,0:T(1,128)}', space=vmem, size = 0x12000, scoped, tag = 'internal scratch']
  %s0 = inlined_call_operand.vmem [shape: f32[2,8,32], index: 0, kind: input, shape index: {}]
  %s1 = inlined_call_operand.vmem [shape: bf16[32,48], index: 1, kind: input, shape index: {}]
  %s2 = inlined_call_operand.vmem [shape: f32[1,48], index: 2, kind: input, shape index: {}]
  %s3 = inlined_call_operand.vmem [shape: bf16[16,32], index: 3, kind: input, shape index: {}]
  %s4 = inlined_call_operand.vmem [shape: f32[1,32], index: 4, kind: input, shape index: {}]
  %s5 = inlined_call_operand.vmem [shape: f32[1,32], index: 5, kind: input, shape index: {}]
  %s6 = inlined_call_operand.vmem [shape: f32[1,32], index: 6, kind: input, shape index: {}]
  %s7 = inlined_call_operand.vmem [shape: bf16[32,512], index: 7, kind: input, shape index: {}]
  %s8 = inlined_call_operand.vmem [shape: f32[1,512], index: 8, kind: input, shape index: {}]
  %s9 = inlined_call_operand.vmem [shape: bf16[512,32], index: 9, kind: input, shape index: {}]
  %s10 = inlined_call_operand.vmem [shape: f32[1,32], index: 10, kind: input, shape index: {}]
  %s11 = inlined_call_operand.vmem [shape: f32[1,32], index: 11, kind: input, shape index: {}]
  %s12 = inlined_call_operand.vmem [shape: f32[1,32], index: 12, kind: input, shape index: {}]
  %s13 = inlined_call_operand.hbm [shape: f32[2,8,32], index: 13, kind: output, shape index: {}]
  %s14 = sld [smem:[#allocation0]]
  $region85: #{tpu_custom_call.1} parent=0
    _
  %s16 = ssub.s32 1, %s14
  %s17 = scalar_select 0, %s16, %s14
  $region1: #{tpu_custom_call.1} parent=0
    #allocation2 [shape = 'u8[8192]{0}', space=vmem, size = 0x2000, scoped, tag = 'output window, operand 0']
    #allocation3 [shape = 's32[2]{0}', space=sflag, size = 0x8, scoped, tag = 'scoped memory for tpu_custom_call.1']
    %18 = vsyncpa [#allocation3], 0
    %s19 = scalar_lea.sflag [#allocation3], 1
    %20 = vsyncpa %s19, 0
    loop: start=0, step=1, limit=4
    $region2: #{tpu_custom_call.1} parent=1 // loop_pre_header
      _
    $region3: #{tpu_custom_call.1} parent=1 // loop_header
      %s22 = sphi 0, %s26
      %p23 = scmp.ge.s32.totalorder %s22, 4
      %s32 = sphi 0, %s34
      %s35 = sphi 0, %s32
      %s36 = sphi 0, %s35
      %s52 = sphi 0, %s36
      %s56 = sphi 0, %s56
      %s58 = sphi 0, %s56
      %s59 = sphi 0, %s58
      %s73 = sphi 0, %s59
      %s77 = sphi 0, %s77
      %s79 = sphi 0, %s77
      %s80 = sphi 0, %s79
      %s94 = sphi 0, %s80
      %s98 = sphi 0, %s98
      %s100 = sphi 0, %s98
      %s101 = sphi 0, %s100
      %s115 = sphi 0, %s101
      %s119 = sphi 0, %s119
      %s121 = sphi 0, %s119
      %s122 = sphi 0, %s121
      %s136 = sphi 0, %s122
      %s140 = sphi 0, %s140
      %s142 = sphi 0, %s140
      %s143 = sphi 0, %s142
      %s157 = sphi 0, %s143
      %s161 = sphi 0, %s161
      %s163 = sphi 0, %s161
      %s164 = sphi 0, %s163
      %s178 = sphi 0, %s164
      %s182 = sphi 0, %s182
      %s184 = sphi 0, %s182
      %s185 = sphi 0, %s184
      %s199 = sphi 0, %s185
      %s203 = sphi 0, %s203
      %s205 = sphi 0, %s203
      %s206 = sphi 0, %s205
      %s220 = sphi 0, %s206
      %s224 = sphi 0, %s224
      %s226 = sphi 0, %s224
      %s227 = sphi 0, %s226
      %s241 = sphi 0, %s227
      %s245 = sphi 0, %s245
      %s247 = sphi 0, %s245
      %s248 = sphi 0, %s247
      %s262 = sphi 0, %s248
      %s266 = sphi 0, %s266
      %s268 = sphi 0, %s266
      %s269 = sphi 0, %s268
      %s283 = sphi 0, %s269
      %s287 = sphi 0, %s287
      %s289 = sphi 0, %s287
      %s290 = sphi 0, %s289
      %s304 = sphi 0, %s290
      %s310 = sphi 0, %s312
      %s313 = sphi 0, %s310
      %s314 = sphi 0, %s313
      %s330 = sphi 0, %s314
    $region4: #{tpu_custom_call.1} parent=1 // loop_header_branch
      %25 = sbr.rel (%p23) target = $region8
    $region5: #{tpu_custom_call.1} parent=1 // loop_body
      %s27 = ssub.s32 %s22, 1
      %s28 = ssub.s32 %s22, 2
      %s29 = sadd.s32 %s22, 1
      %s30 = ssub.s32 %s22, %s29
      %p31 = scmp.eq.s32.totalorder %s30, 0
      %s33 = sadd.s32 %s32, 1
      %s34 = scalar_select %p31, %s32, %s33
      %p37 = pneg %p31
      %p38 = scmp.eq.s32.totalorder %s22, 1
      %p39 = por %p37, %p38
      %p40 = scmp.ne.s32.totalorder %s32, %s35
      %p41 = scmp.eq.s32.totalorder %s22, 0
      %p42 = por %p40, %p41
      %p43 = scmp.ne.s32.totalorder %s32, %s35
      %p44 = scmp.eq.s32.totalorder %s27, 1
      %p45 = por %p43, %p44
      %p46 = scmp.ne.s32.totalorder %s35, %s36
      %p47 = scmp.eq.s32.totalorder %s27, 0
      %p48 = por %p46, %p47
      %p49 = scmp.ne.s32.totalorder %s35, %s36
      %p50 = scmp.eq.s32.totalorder %s28, 1
      %p51 = por %p49, %p50
      %p53 = scmp.ne.s32.totalorder %s36, %s52
      %p54 = scmp.eq.s32.totalorder %s28, 0
      %p55 = por %p53, %p54
      %s57 = sadd.s32 %s56, 1
      %p60 = scmp.eq.s32.totalorder %s22, 1
      %p61 = scmp.ne.s32.totalorder %s56, %s58
      %p62 = scmp.eq.s32.totalorder %s22, 0
      %p63 = por %p61, %p62
      %p64 = scmp.ne.s32.totalorder %s56, %s58
      %p65 = scmp.eq.s32.totalorder %s27, 1
      %p66 = por %p64, %p65
      %p67 = scmp.ne.s32.totalorder %s58, %s59
      %p68 = scmp.eq.s32.totalorder %s27, 0
      %p69 = por %p67, %p68
      %p70 = scmp.ne.s32.totalorder %s58, %s59
      %p71 = scmp.eq.s32.totalorder %s28, 1
      %p72 = por %p70, %p71
      %p74 = scmp.ne.s32.totalorder %s59, %s73
      %p75 = scmp.eq.s32.totalorder %s28, 0
      %p76 = por %p74, %p75
      %s78 = sadd.s32 %s77, 1
      %p81 = scmp.eq.s32.totalorder %s22, 1
      %p82 = scmp.ne.s32.totalorder %s77, %s79
      %p83 = scmp.eq.s32.totalorder %s22, 0
      %p84 = por %p82, %p83
      %p85 = scmp.ne.s32.totalorder %s77, %s79
      %p86 = scmp.eq.s32.totalorder %s27, 1
      %p87 = por %p85, %p86
      %p88 = scmp.ne.s32.totalorder %s79, %s80
      %p89 = scmp.eq.s32.totalorder %s27, 0
      %p90 = por %p88, %p89
      %p91 = scmp.ne.s32.totalorder %s79, %s80
      %p92 = scmp.eq.s32.totalorder %s28, 1
      %p93 = por %p91, %p92
      %p95 = scmp.ne.s32.totalorder %s80, %s94
      %p96 = scmp.eq.s32.totalorder %s28, 0
      %p97 = por %p95, %p96
      %s99 = sadd.s32 %s98, 1
      %p102 = scmp.eq.s32.totalorder %s22, 1
      %p103 = scmp.ne.s32.totalorder %s98, %s100
      %p104 = scmp.eq.s32.totalorder %s22, 0
      %p105 = por %p103, %p104
      %p106 = scmp.ne.s32.totalorder %s98, %s100
      %p107 = scmp.eq.s32.totalorder %s27, 1
      %p108 = por %p106, %p107
      %p109 = scmp.ne.s32.totalorder %s100, %s101
      %p110 = scmp.eq.s32.totalorder %s27, 0
      %p111 = por %p109, %p110
      %p112 = scmp.ne.s32.totalorder %s100, %s101
      %p113 = scmp.eq.s32.totalorder %s28, 1
      %p114 = por %p112, %p113
      %p116 = scmp.ne.s32.totalorder %s101, %s115
      %p117 = scmp.eq.s32.totalorder %s28, 0
      %p118 = por %p116, %p117
      %s120 = sadd.s32 %s119, 1
      %p123 = scmp.eq.s32.totalorder %s22, 1
      %p124 = scmp.ne.s32.totalorder %s119, %s121
      %p125 = scmp.eq.s32.totalorder %s22, 0
      %p126 = por %p124, %p125
      %p127 = scmp.ne.s32.totalorder %s119, %s121
      %p128 = scmp.eq.s32.totalorder %s27, 1
      %p129 = por %p127, %p128
      %p130 = scmp.ne.s32.totalorder %s121, %s122
      %p131 = scmp.eq.s32.totalorder %s27, 0
      %p132 = por %p130, %p131
      %p133 = scmp.ne.s32.totalorder %s121, %s122
      %p134 = scmp.eq.s32.totalorder %s28, 1
      %p135 = por %p133, %p134
      %p137 = scmp.ne.s32.totalorder %s122, %s136
      %p138 = scmp.eq.s32.totalorder %s28, 0
      %p139 = por %p137, %p138
      %s141 = sadd.s32 %s140, 1
      %p144 = scmp.eq.s32.totalorder %s22, 1
      %p145 = scmp.ne.s32.totalorder %s140, %s142
      %p146 = scmp.eq.s32.totalorder %s22, 0
      %p147 = por %p145, %p146
      %p148 = scmp.ne.s32.totalorder %s140, %s142
      %p149 = scmp.eq.s32.totalorder %s27, 1
      %p150 = por %p148, %p149
      %p151 = scmp.ne.s32.totalorder %s142, %s143
      %p152 = scmp.eq.s32.totalorder %s27, 0
      %p153 = por %p151, %p152
      %p154 = scmp.ne.s32.totalorder %s142, %s143
      %p155 = scmp.eq.s32.totalorder %s28, 1
      %p156 = por %p154, %p155
      %p158 = scmp.ne.s32.totalorder %s143, %s157
      %p159 = scmp.eq.s32.totalorder %s28, 0
      %p160 = por %p158, %p159
      %s162 = sadd.s32 %s161, 1
      %p165 = scmp.eq.s32.totalorder %s22, 1
      %p166 = scmp.ne.s32.totalorder %s161, %s163
      %p167 = scmp.eq.s32.totalorder %s22, 0
      %p168 = por %p166, %p167
      %p169 = scmp.ne.s32.totalorder %s161, %s163
      %p170 = scmp.eq.s32.totalorder %s27, 1
      %p171 = por %p169, %p170
      %p172 = scmp.ne.s32.totalorder %s163, %s164
      %p173 = scmp.eq.s32.totalorder %s27, 0
      %p174 = por %p172, %p173
      %p175 = scmp.ne.s32.totalorder %s163, %s164
      %p176 = scmp.eq.s32.totalorder %s28, 1
      %p177 = por %p175, %p176
      %p179 = scmp.ne.s32.totalorder %s164, %s178
      %p180 = scmp.eq.s32.totalorder %s28, 0
      %p181 = por %p179, %p180
      %s183 = sadd.s32 %s182, 1
      %p186 = scmp.eq.s32.totalorder %s22, 1
      %p187 = scmp.ne.s32.totalorder %s182, %s184
      %p188 = scmp.eq.s32.totalorder %s22, 0
      %p189 = por %p187, %p188
      %p190 = scmp.ne.s32.totalorder %s182, %s184
      %p191 = scmp.eq.s32.totalorder %s27, 1
      %p192 = por %p190, %p191
      %p193 = scmp.ne.s32.totalorder %s184, %s185
      %p194 = scmp.eq.s32.totalorder %s27, 0
      %p195 = por %p193, %p194
      %p196 = scmp.ne.s32.totalorder %s184, %s185
      %p197 = scmp.eq.s32.totalorder %s28, 1
      %p198 = por %p196, %p197
      %p200 = scmp.ne.s32.totalorder %s185, %s199
      %p201 = scmp.eq.s32.totalorder %s28, 0
      %p202 = por %p200, %p201
      %s204 = sadd.s32 %s203, 1
      %p207 = scmp.eq.s32.totalorder %s22, 1
      %p208 = scmp.ne.s32.totalorder %s203, %s205
      %p209 = scmp.eq.s32.totalorder %s22, 0
      %p210 = por %p208, %p209
      %p211 = scmp.ne.s32.totalorder %s203, %s205
      %p212 = scmp.eq.s32.totalorder %s27, 1
      %p213 = por %p211, %p212
      %p214 = scmp.ne.s32.totalorder %s205, %s206
      %p215 = scmp.eq.s32.totalorder %s27, 0
      %p216 = por %p214, %p215
      %p217 = scmp.ne.s32.totalorder %s205, %s206
      %p218 = scmp.eq.s32.totalorder %s28, 1
      %p219 = por %p217, %p218
      %p221 = scmp.ne.s32.totalorder %s206, %s220
      %p222 = scmp.eq.s32.totalorder %s28, 0
      %p223 = por %p221, %p222
      %s225 = sadd.s32 %s224, 1
      %p228 = scmp.eq.s32.totalorder %s22, 1
      %p229 = scmp.ne.s32.totalorder %s224, %s226
      %p230 = scmp.eq.s32.totalorder %s22, 0
      %p231 = por %p229, %p230
      %p232 = scmp.ne.s32.totalorder %s224, %s226
      %p233 = scmp.eq.s32.totalorder %s27, 1
      %p234 = por %p232, %p233
      %p235 = scmp.ne.s32.totalorder %s226, %s227
      %p236 = scmp.eq.s32.totalorder %s27, 0
      %p237 = por %p235, %p236
      %p238 = scmp.ne.s32.totalorder %s226, %s227
      %p239 = scmp.eq.s32.totalorder %s28, 1
      %p240 = por %p238, %p239
      %p242 = scmp.ne.s32.totalorder %s227, %s241
      %p243 = scmp.eq.s32.totalorder %s28, 0
      %p244 = por %p242, %p243
      %s246 = sadd.s32 %s245, 1
      %p249 = scmp.eq.s32.totalorder %s22, 1
      %p250 = scmp.ne.s32.totalorder %s245, %s247
      %p251 = scmp.eq.s32.totalorder %s22, 0
      %p252 = por %p250, %p251
      %p253 = scmp.ne.s32.totalorder %s245, %s247
      %p254 = scmp.eq.s32.totalorder %s27, 1
      %p255 = por %p253, %p254
      %p256 = scmp.ne.s32.totalorder %s247, %s248
      %p257 = scmp.eq.s32.totalorder %s27, 0
      %p258 = por %p256, %p257
      %p259 = scmp.ne.s32.totalorder %s247, %s248
      %p260 = scmp.eq.s32.totalorder %s28, 1
      %p261 = por %p259, %p260
      %p263 = scmp.ne.s32.totalorder %s248, %s262
      %p264 = scmp.eq.s32.totalorder %s28, 0
      %p265 = por %p263, %p264
      %s267 = sadd.s32 %s266, 1
      %p270 = scmp.eq.s32.totalorder %s22, 1
      %p271 = scmp.ne.s32.totalorder %s266, %s268
      %p272 = scmp.eq.s32.totalorder %s22, 0
      %p273 = por %p271, %p272
      %p274 = scmp.ne.s32.totalorder %s266, %s268
      %p275 = scmp.eq.s32.totalorder %s27, 1
      %p276 = por %p274, %p275
      %p277 = scmp.ne.s32.totalorder %s268, %s269
      %p278 = scmp.eq.s32.totalorder %s27, 0
      %p279 = por %p277, %p278
      %p280 = scmp.ne.s32.totalorder %s268, %s269
      %p281 = scmp.eq.s32.totalorder %s28, 1
      %p282 = por %p280, %p281
      %p284 = scmp.ne.s32.totalorder %s269, %s283
      %p285 = scmp.eq.s32.totalorder %s28, 0
      %p286 = por %p284, %p285
      %s288 = sadd.s32 %s287, 1
      %p291 = scmp.eq.s32.totalorder %s22, 1
      %p292 = scmp.ne.s32.totalorder %s287, %s289
      %p293 = scmp.eq.s32.totalorder %s22, 0
      %p294 = por %p292, %p293
      %p295 = scmp.ne.s32.totalorder %s287, %s289
      %p296 = scmp.eq.s32.totalorder %s27, 1
      %p297 = por %p295, %p296
      %p298 = scmp.ne.s32.totalorder %s289, %s290
      %p299 = scmp.eq.s32.totalorder %s27, 0
      %p300 = por %p298, %p299
      %p301 = scmp.ne.s32.totalorder %s289, %s290
      %p302 = scmp.eq.s32.totalorder %s28, 1
      %p303 = por %p301, %p302
      %p305 = scmp.ne.s32.totalorder %s290, %s304
      %p306 = scmp.eq.s32.totalorder %s28, 0
      %p307 = por %p305, %p306
      %s308 = ssub.s32 %s22, %s29
      %p309 = scmp.eq.s32.totalorder %s308, 0
      %s311 = sadd.s32 %s310, 1
      %s312 = scalar_select %p309, %s310, %s311
      %p315 = pneg %p309
      %p316 = scmp.eq.s32.totalorder %s22, 1
      %p317 = por %p315, %p316
      %p318 = scmp.ne.s32.totalorder %s310, %s313
      %p319 = scmp.eq.s32.totalorder %s22, 0
      %p320 = por %p318, %p319
      %p321 = scmp.ne.s32.totalorder %s310, %s313
      %p322 = scmp.eq.s32.totalorder %s27, 1
      %p323 = por %p321, %p322
      %p324 = scmp.ne.s32.totalorder %s313, %s314
      %p325 = scmp.eq.s32.totalorder %s27, 0
      %p326 = por %p324, %p325
      %p327 = scmp.ne.s32.totalorder %s313, %s314
      %p328 = scmp.eq.s32.totalorder %s28, 1
      %p329 = por %p327, %p328
      %p331 = scmp.ne.s32.totalorder %s314, %s330
      %p332 = scmp.eq.s32.totalorder %s28, 0
      %p333 = por %p331, %p332
      %p334 = scmp.le.s32.totalorder 1, %s22
      %p335 = scmp.lt.s32.totalorder %s22, 3
      %p336 = pnand %p334, %p335
      %p337 = pneg %p336
      // Predicated region
      $region9: #{tpu_custom_call.1} parent=5 // pred_check
        _
      $region10: #{tpu_custom_call.1} parent=5 // pred_check_branch
        %339 = sbr.rel (%p336) target = $region12
      $region11: #{tpu_custom_call.1} parent=5 // pred_region
        %s340 = ssub.s32 %s22, 1
        // Predicated region
        $region13: #{tpu_custom_call.1} parent=11 // pred_check
          %p341 = pneg %p69
        $region14: #{tpu_custom_call.1} parent=11 // pred_check_branch
          %343 = sbr.rel (%p341) target = $region16
        $region15: #{tpu_custom_call.1} parent=11 // pred_region
          _
        $region16: #{tpu_custom_call.1} parent=11 // pred_fallthru
          _
        // Predicated region
        $region17: #{tpu_custom_call.1} parent=11 // pred_check
          %p344 = pneg %p90
        $region18: #{tpu_custom_call.1} parent=11 // pred_check_branch
          %346 = sbr.rel (%p344) target = $region20
        $region19: #{tpu_custom_call.1} parent=11 // pred_region
          _
        $region20: #{tpu_custom_call.1} parent=11 // pred_fallthru
          _
        // Predicated region
        $region21: #{tpu_custom_call.1} parent=11 // pred_check
          %p347 = pneg %p111
        $region22: #{tpu_custom_call.1} parent=11 // pred_check_branch
          %349 = sbr.rel (%p347) target = $region24
        $region23: #{tpu_custom_call.1} parent=11 // pred_region
          _
        $region24: #{tpu_custom_call.1} parent=11 // pred_fallthru
          _
        // Predicated region
        $region25: #{tpu_custom_call.1} parent=11 // pred_check
          %p350 = pneg %p132
        $region26: #{tpu_custom_call.1} parent=11 // pred_check_branch
          %352 = sbr.rel (%p350) target = $region28
        $region27: #{tpu_custom_call.1} parent=11 // pred_region
          _
        $region28: #{tpu_custom_call.1} parent=11 // pred_fallthru
          _
        // Predicated region
        $region29: #{tpu_custom_call.1} parent=11 // pred_check
          %p353 = pneg %p153
        $region30: #{tpu_custom_call.1} parent=11 // pred_check_branch
          %355 = sbr.rel (%p353) target = $region32
        $region31: #{tpu_custom_call.1} parent=11 // pred_region
          _
        $region32: #{tpu_custom_call.1} parent=11 // pred_fallthru
          _
        // Predicated region
        $region33: #{tpu_custom_call.1} parent=11 // pred_check
          %p356 = pneg %p174
        $region34: #{tpu_custom_call.1} parent=11 // pred_check_branch
          %358 = sbr.rel (%p356) target = $region36
        $region35: #{tpu_custom_call.1} parent=11 // pred_region
          _
        $region36: #{tpu_custom_call.1} parent=11 // pred_fallthru
          _
        // Predicated region
        $region37: #{tpu_custom_call.1} parent=11 // pred_check
          %p359 = pneg %p195
        $region38: #{tpu_custom_call.1} parent=11 // pred_check_branch
          %361 = sbr.rel (%p359) target = $region40
        $region39: #{tpu_custom_call.1} parent=11 // pred_region
          _
        $region40: #{tpu_custom_call.1} parent=11 // pred_fallthru
          _
        // Predicated region
        $region41: #{tpu_custom_call.1} parent=11 // pred_check
          %p362 = pneg %p216
        $region42: #{tpu_custom_call.1} parent=11 // pred_check_branch
          %364 = sbr.rel (%p362) target = $region44
        $region43: #{tpu_custom_call.1} parent=11 // pred_region
          _
        $region44: #{tpu_custom_call.1} parent=11 // pred_fallthru
          _
        // Predicated region
        $region45: #{tpu_custom_call.1} parent=11 // pred_check
          %p365 = pneg %p237
        $region46: #{tpu_custom_call.1} parent=11 // pred_check_branch
          %367 = sbr.rel (%p365) target = $region48
        $region47: #{tpu_custom_call.1} parent=11 // pred_region
          _
        $region48: #{tpu_custom_call.1} parent=11 // pred_fallthru
          _
        // Predicated region
        $region49: #{tpu_custom_call.1} parent=11 // pred_check
          %p368 = pneg %p258
        $region50: #{tpu_custom_call.1} parent=11 // pred_check_branch
          %370 = sbr.rel (%p368) target = $region52
        $region51: #{tpu_custom_call.1} parent=11 // pred_region
          _
        $region52: #{tpu_custom_call.1} parent=11 // pred_fallthru
          _
        // Predicated region
        $region53: #{tpu_custom_call.1} parent=11 // pred_check
          %p371 = pneg %p279
        $region54: #{tpu_custom_call.1} parent=11 // pred_check_branch
          %373 = sbr.rel (%p371) target = $region56
        $region55: #{tpu_custom_call.1} parent=11 // pred_region
          _
        $region56: #{tpu_custom_call.1} parent=11 // pred_fallthru
          _
        // Predicated region
        $region57: #{tpu_custom_call.1} parent=11 // pred_check
          %p374 = pneg %p300
        $region58: #{tpu_custom_call.1} parent=11 // pred_check_branch
          %376 = sbr.rel (%p374) target = $region60
        $region59: #{tpu_custom_call.1} parent=11 // pred_region
          _
        $region60: #{tpu_custom_call.1} parent=11 // pred_fallthru
          _
      $region12: #{tpu_custom_call.1} parent=5 // pred_fallthru
        _
      %p377 = scmp.lt.s32.totalorder %s22, 2
      // Predicated region
      $region61: #{tpu_custom_call.1} parent=5 // pred_check
        %p378 = pneg %p377
      $region62: #{tpu_custom_call.1} parent=5 // pred_check_branch
        %380 = sbr.rel (%p378) target = $region64
      $region63: #{tpu_custom_call.1} parent=5 // pred_region
        // Predicated region
        $region65: #{tpu_custom_call.1} parent=63 // pred_check
          %p381 = pneg %p42
        $region66: #{tpu_custom_call.1} parent=63 // pred_check_branch
          %383 = sbr.rel (%p381) target = $region68
        $region67: #{tpu_custom_call.1} parent=63 // pred_region
          %p384 = scmp.lt.s32.totalorder %s22, 1
          %s385 = scalar_select %p384, %s22, 1
          %s386 = smul.addr %s385, 8
          %s387 = scalar_lea.vmem %s0, %s386
        $region68: #{tpu_custom_call.1} parent=63 // pred_fallthru
          _
      $region64: #{tpu_custom_call.1} parent=5 // pred_fallthru
        _
      %p388 = scmp.le.s32.totalorder 1, %s22
      %p389 = scmp.lt.s32.totalorder %s22, 3
      %p390 = pnand %p388, %p389
      %p391 = pneg %p390
      // Predicated region
      $region69: #{tpu_custom_call.1} parent=5 // pred_check
        _
      $region70: #{tpu_custom_call.1} parent=5 // pred_check_branch
        %393 = sbr.rel (%p390) target = $region72
      $region71: #{tpu_custom_call.1} parent=5 // pred_region
        %s394 = ssub.s32 %s22, 1
        %p395 = scmp.lt.s32.totalorder %s27, 1
        %s396 = scalar_select %p395, %s27, 1
        %s397 = smul.addr %s396, 8
        %s398 = scalar_lea.vmem %s0, %s397
        %p399 = pneg %p48
        %p400 = pneg %p45
        %p401 = pneg %p69
        %p402 = pneg %p66
        %p403 = pneg %p90
        %p404 = pneg %p87
        %p405 = pneg %p111
        %p406 = pneg %p108
        %p407 = pneg %p132
        %p408 = pneg %p129
        %p409 = pneg %p153
        %p410 = pneg %p150
        %p411 = pneg %p174
        %p412 = pneg %p171
        %p413 = pneg %p195
        %p414 = pneg %p192
        %p415 = pneg %p216
        %p416 = pneg %p213
        %p417 = pneg %p237
        %p418 = pneg %p234
        %p419 = pneg %p258
        %p420 = pneg %p255
        %p421 = pneg %p279
        %p422 = pneg %p276
        %p423 = pneg %p300
        %p424 = pneg %p297
        %p425 = pneg %p326
        %p426 = pneg %p323
        %s427 = sand.u32 %s313, 1
        %s428 = scalar_lea.sflag [#allocation3], %s427
        %s429 = sand.u32 %s313, 1
        %s430 = smul.addr %s429, 8
        %s431 = scalar_lea.vmem [#allocation2], %s430
        %p432 = scmp.lt.s32.totalorder %s27, 1
        %s433 = scalar_select %p432, %s27, 1
        %s434 = smul.addr %s433, 8
        %s435 = scalar_lea.vmem %s0, %s434
        %v437 = vld [vmem:[%s435] sm:$0xff]
        %v438 = vpack.c.bf16 %v437, %v437
        %v439 = vld [vmem:[%s1] sm:$0xf]
        %v440 = vld [vmem:[%s1 + $0x4] sm:$0xf]
        %v441 = vld [vmem:[%s1 + $0x8] sm:$0xf]
        %v442 = vld [vmem:[%s1 + $0xc] sm:$0xf]
        %v443 = vld [vmem:[%s2] sm:$0x1]
        %v445 = vlaneseq
        %v446 = vshrl.u32 %v445, 7
        %v447 = vsub.s32 0, %v446
        %v448 = vrot.slane %v443, %v447
        %v454 = vunpack.c.l.b16 %v439
        %v455 = vunpack.c.l.b16 %v440
        %v456 = vunpack.c.l.b16 %v441
        %v457 = vunpack.c.l.b16 %v442
        %v458 = vpack.c.b16 %v455, %v454
        %v459 = vpack.c.b16 %v457, %v456
        %vm462 = vcmask 261120
        %v464 = vsel %vm462, %v438, 0
        %466 = vmatprep.subr.bf16.mxu0 0
        %467 = vmatpush1.bf16.msra.mxu0 %v458
        %468 = vmatprep.subr.bf16.mxu0 0
        %469 = vmatpush1.bf16.msra.mxu0 %v459
        %470 = vmatprep.subr.bf16.mxu0 0
        %471 = vmatpush1.bf16.msra.mxu0 0
        %472 = vmatprep.subr.bf16.mxu0 0
        %473 = vmatpush1.bf16.msra.mxu0 0
        %474 = vmatprep.subr.bf16.mxu0 0
        %475 = vmatpush1.bf16.msra.mxu0 0
        %476 = vmatprep.subr.bf16.mxu0 0
        %477 = vmatpush1.bf16.msra.mxu0 0
        %478 = vmatprep.subr.bf16.mxu0 0
        %479 = vmatpush1.bf16.msra.mxu0 0
        %480 = vmatprep.subr.bf16.mxu0 0
        %481 = vmatpush1.bf16.msra.mxu0 0
        %482 = vmatprep.subr.bf16.mxu0 0
        %483 = vmatpush1.bf16.msra.mxu0 0
        %484 = vmatprep.subr.bf16.mxu0 0
        %485 = vmatpush1.bf16.msra.mxu0 0
        %486 = vmatprep.subr.bf16.mxu0 0
        %487 = vmatpush1.bf16.msra.mxu0 0
        %488 = vmatprep.subr.bf16.mxu0 0
        %489 = vmatpush1.bf16.msra.mxu0 0
        %490 = vmatprep.subr.bf16.mxu0 0
        %491 = vmatpush1.bf16.msra.mxu0 0
        %492 = vmatprep.subr.bf16.mxu0 0
        %493 = vmatpush1.bf16.msra.mxu0 0
        %494 = vmatprep.subr.bf16.mxu0 0
        %495 = vmatpush1.bf16.msra.mxu0 0
        %496 = vmatprep.subr.bf16.mxu0 0
        %497 = vmatpush1.bf16.msra.mxu0 0
        %498 = vmatprep.mubr.bf16.mxu0 0
        %499 = vmatmul.mubr.bf16.gmra.mrb[0].mxu0 %v464
        %v500 = vpop.f32.mrb[0].mxu0
        %v501 = vadd.f32 %v448, %v500
        %v502 = vpop.f32.mrb[0].mxu0
        %v503 = vpop.f32.mrb[0].mxu0
        %v504 = vpop.f32.mrb[0].mxu0
        %505 = vdwg.mxu0
        %507 = vrot.lane.b32.xlu0 %v501, 112
        %v508 = vpop.permute.xlu0 %507
        %vm509 = vcmask 130048
        %v510 = vsel %vm509, %v501, 0
        %v512 = vsel %vm509, %v508, 0
        %514 = vmatprep.subr.mxu0 0.0
        %515 = vmatpush1.xpose.msra.mxu0 %v512
        %516 = vmatprep.subr.mxu0 0.0
        %517 = vmatpush1.xpose.msra.mxu0 0.0
        %518 = vmatprep.subr.mxu0 0.0
        %519 = vmatpush1.xpose.msra.mxu0 0.0
        %520 = vmatprep.subr.mxu0 0.0
        %521 = vmatpush1.xpose.msra.mxu0 0.0
        %522 = vmatprep.subr.mxu0 0.0
        %523 = vmatpush1.xpose.msra.mxu0 0.0
        %524 = vmatprep.subr.mxu0 0.0
        %525 = vmatpush1.xpose.msra.mxu0 0.0
        %526 = vmatprep.subr.mxu0 0.0
        %527 = vmatpush1.xpose.msra.mxu0 0.0
        %528 = vmatprep.subr.mxu0 0.0
        %529 = vmatpush1.xpose.msra.mxu0 0.0
        %530 = vmatprep.subr.mxu0 0.0
        %531 = vmatpush1.xpose.msra.mxu0 0.0
        %532 = vmatprep.subr.mxu0 0.0
        %533 = vmatpush1.xpose.msra.mxu0 0.0
        %534 = vmatprep.subr.mxu0 0.0
        %535 = vmatpush1.xpose.msra.mxu0 0.0
        %536 = vmatprep.subr.mxu0 0.0
        %537 = vmatpush1.xpose.msra.mxu0 0.0
        %538 = vmatprep.subr.mxu0 0.0
        %539 = vmatpush1.xpose.msra.mxu0 0.0
        %540 = vmatprep.subr.mxu0 0.0
        %541 = vmatpush1.xpose.msra.mxu0 0.0
        %542 = vmatprep.subr.mxu0 0.0
        %543 = vmatpush1.xpose.msra.mxu0 0.0
        %544 = vmatprep.subr.mxu0 0.0
        %545 = vmatpush1.xpose.msra.mxu0 0.0
        %546 = vmatprep.subr.mxu0 0.0
        %547 = vmatpush1.xpose.msra.mxu0 0.0
        %548 = vmatprep.subr.mxu0 0.0
        %549 = vmatpush1.xpose.msra.mxu0 0.0
        %550 = vmatprep.subr.mxu0 0.0
        %551 = vmatpush1.xpose.msra.mxu0 0.0
        %552 = vmatprep.subr.mxu0 0.0
        %553 = vmatpush1.xpose.msra.mxu0 0.0
        %554 = vmatprep.subr.mxu0 0.0
        %555 = vmatpush1.xpose.msra.mxu0 0.0
        %556 = vmatprep.subr.mxu0 0.0
        %557 = vmatpush1.xpose.msra.mxu0 0.0
        %558 = vmatprep.subr.mxu0 0.0
        %559 = vmatpush1.xpose.msra.mxu0 0.0
        %560 = vmatprep.subr.mxu0 0.0
        %561 = vmatpush1.xpose.msra.mxu0 0.0
        %562 = vmatprep.subr.mxu0 0.0
        %563 = vmatpush1.xpose.msra.mxu0 0.0
        %564 = vmatprep.subr.mxu0 0.0
        %565 = vmatpush1.xpose.msra.mxu0 0.0
        %566 = vmatprep.subr.mxu0 0.0
        %567 = vmatpush1.xpose.msra.mxu0 0.0
        %568 = vmatprep.subr.mxu0 0.0
        %569 = vmatpush1.xpose.msra.mxu0 0.0
        %570 = vmatprep.subr.mxu0 0.0
        %571 = vmatpush1.xpose.msra.mxu0 0.0
        %572 = vmatprep.subr.mxu0 0.0
        %573 = vmatpush1.xpose.msra.mxu0 0.0
        %574 = vmatprep.subr.mxu0 0.0
        %575 = vmatpush1.xpose.msra.mxu0 0.0
        %576 = vmatprep.subr.mxu0 0.0
        %577 = vmatpush1.xpose.msra.mxu0 0.0
        %578 = vmatprep.mubr.f32.mxu0 0.0
        %579 = vmatmul.mubr.f32.gmra.mrb[0].mxu0 %v510
        %v580 = vpop.f32.mrb[0].mxu0
        %v581 = vadd.f32 0.0, %v580
        %v582 = vpop.f32.mrb[0].mxu0
        %583 = vdwg.mxu0
        %vm584 = vcmask 64512
        %v585 = vsel %vm584, %v581, -inf
        %586 = vmax.xlane.f32.xlu0 %v585
        %v587 = vpop.xlane.xlu0 %586
        %v588 = vsub.f32 %v581, %v587
        %v589 = vmul.f32 %v588, 1.442695
        %v590 = vpow.pop %v589
        %v591 = vsel %vm584, %v590, 0.0
        %592 = vadd.xlane.f32.xlu0 %v591
        %v593 = vpop.xlane.xlu0 %592
        %v594 = vrcp.pop %v593
        %v595 = vmul.f32 %v590, %v594
        %v596 = vpack.c.bf16 %v595, %v595
        %v597 = vpack.c.bf16 %v501, %v501
        %599 = vrot.lane.b32.xlu0 %v597, 96
        %v600 = vpop.permute.xlu0 %599
        %v602 = vsel %vm584, %v596, 0
        %vm604 = vcmask 1043456
        %v606 = vsel %vm604, %v600, 0
        %608 = vmatprep.subr.bf16.mxu0 0
        %609 = vmatpush1.bf16.msra.mxu0 %v606
        %610 = vmatprep.subr.bf16.mxu0 0
        %611 = vmatpush1.bf16.msra.mxu0 0
        %612 = vmatprep.subr.bf16.mxu0 0
        %613 = vmatpush1.bf16.msra.mxu0 0
        %614 = vmatprep.subr.bf16.mxu0 0
        %615 = vmatpush1.bf16.msra.mxu0 0
        %616 = vmatprep.subr.bf16.mxu0 0
        %617 = vmatpush1.bf16.msra.mxu0 0
        %618 = vmatprep.subr.bf16.mxu0 0
        %619 = vmatpush1.bf16.msra.mxu0 0
        %620 = vmatprep.subr.bf16.mxu0 0
        %621 = vmatpush1.bf16.msra.mxu0 0
        %622 = vmatprep.subr.bf16.mxu0 0
        %623 = vmatpush1.bf16.msra.mxu0 0
        %624 = vmatprep.subr.bf16.mxu0 0
        %625 = vmatpush1.bf16.msra.mxu0 0
        %626 = vmatprep.subr.bf16.mxu0 0
        %627 = vmatpush1.bf16.msra.mxu0 0
        %628 = vmatprep.subr.bf16.mxu0 0
        %629 = vmatpush1.bf16.msra.mxu0 0
        %630 = vmatprep.subr.bf16.mxu0 0
        %631 = vmatpush1.bf16.msra.mxu0 0
        %632 = vmatprep.subr.bf16.mxu0 0
        %633 = vmatpush1.bf16.msra.mxu0 0
        %634 = vmatprep.subr.bf16.mxu0 0
        %635 = vmatpush1.bf16.msra.mxu0 0
        %636 = vmatprep.subr.bf16.mxu0 0
        %637 = vmatpush1.bf16.msra.mxu0 0
        %638 = vmatprep.subr.bf16.mxu0 0
        %639 = vmatpush1.bf16.msra.mxu0 0
        %640 = vmatprep.mubr.bf16.mxu0 0
        %641 = vmatmul.mubr.bf16.gmra.mrb[0].mxu0 %v602
        %v642 = vpop.f32.mrb[0].mxu0
        %v643 = vadd.f32 0.0, %v642
        %v644 = vpop.f32.mrb[0].mxu0
        %v645 = vpop.f32.mrb[0].mxu0
        %v646 = vpop.f32.mrb[0].mxu0
        %647 = vdwg.mxu0
        %v648 = vpack.c.bf16 %v643, %v643
        %v649 = vld [vmem:[%s3] sm:$0xf]
        %v650 = vld [vmem:[%s3 + $0x4] sm:$0xf]
        %v651 = vld [vmem:[%s4] sm:$0x1]
        %v653 = vlaneseq
        %v654 = vshrl.u32 %v653, 7
        %v655 = vsub.s32 0, %v654
        %v656 = vrot.slane %v651, %v655
        %v660 = vunpack.c.l.b16 %v649
        %v661 = vunpack.c.l.b16 %v650
        %v662 = vpack.c.b16 %v661, %v660
        %v665 = vsel %vm509, %v648, 0
        %667 = vmatprep.subr.bf16.mxu0 0
        %668 = vmatpush1.bf16.msra.mxu0 %v662
        %669 = vmatprep.subr.bf16.mxu0 0
        %670 = vmatpush1.bf16.msra.mxu0 0
        %671 = vmatprep.subr.bf16.mxu0 0
        %672 = vmatpush1.bf16.msra.mxu0 0
        %673 = vmatprep.subr.bf16.mxu0 0
        %674 = vmatpush1.bf16.msra.mxu0 0
        %675 = vmatprep.subr.bf16.mxu0 0
        %676 = vmatpush1.bf16.msra.mxu0 0
        %677 = vmatprep.subr.bf16.mxu0 0
        %678 = vmatpush1.bf16.msra.mxu0 0
        %679 = vmatprep.subr.bf16.mxu0 0
        %680 = vmatpush1.bf16.msra.mxu0 0
        %681 = vmatprep.subr.bf16.mxu0 0
        %682 = vmatpush1.bf16.msra.mxu0 0
        %683 = vmatprep.subr.bf16.mxu0 0
        %684 = vmatpush1.bf16.msra.mxu0 0
        %685 = vmatprep.subr.bf16.mxu0 0
        %686 = vmatpush1.bf16.msra.mxu0 0
        %687 = vmatprep.subr.bf16.mxu0 0
        %688 = vmatpush1.bf16.msra.mxu0 0
        %689 = vmatprep.subr.bf16.mxu0 0
        %690 = vmatpush1.bf16.msra.mxu0 0
        %691 = vmatprep.subr.bf16.mxu0 0
        %692 = vmatpush1.bf16.msra.mxu0 0
        %693 = vmatprep.subr.bf16.mxu0 0
        %694 = vmatpush1.bf16.msra.mxu0 0
        %695 = vmatprep.subr.bf16.mxu0 0
        %696 = vmatpush1.bf16.msra.mxu0 0
        %697 = vmatprep.subr.bf16.mxu0 0
        %698 = vmatpush1.bf16.msra.mxu0 0
        %699 = vmatprep.mubr.bf16.mxu0 0
        %700 = vmatmul.mubr.bf16.gmra.mrb[0].mxu0 %v665
        %v701 = vpop.f32.mrb[0].mxu0
        %v702 = vadd.f32 %v656, %v701
        %v703 = vpop.f32.mrb[0].mxu0
        %v704 = vpop.f32.mrb[0].mxu0
        %v705 = vpop.f32.mrb[0].mxu0
        %706 = vdwg.mxu0
        %v707 = vadd.f32 %v437, %v702
        %v708 = vld [vmem:[%s5] sm:$0x1]
        %v709 = vld [vmem:[%s6] sm:$0x1]
        %v710 = vsel %vm462, %v707, 0.0
        %711 = vadd.xlane.f32.xlu0 %v710
        %v712 = vpop.xlane.xlu0 %711
        %v713 = vrcp.pop 32.0
        %v714 = vmul.f32 %v712, %v713
        %v715 = vsub.f32 %v707, %v714
        %v716 = vmul.f32 %v715, %v715
        %v717 = vsel %vm462, %v716, 0.0
        %718 = vadd.xlane.f32.xlu0 %v717
        %v719 = vpop.xlane.xlu0 %718
        %v720 = vmul.f32 %v719, %v713
        %v721 = vadd.f32 %v720, 1e-05
        %v722 = vrsqrt.pop %v721
        %v723 = vmul.f32 %v715, %v722
        %v725 = vlaneseq
        %v726 = vshrl.u32 %v725, 7
        %v727 = vsub.s32 0, %v726
        %v728 = vrot.slane %v708, %v727
        %v730 = vmul.f32 %v723, %v728
        %v732 = vlaneseq
        %v733 = vshrl.u32 %v732, 7
        %v734 = vsub.s32 0, %v733
        %v735 = vrot.slane %v709, %v734
        %v737 = vadd.f32 %v730, %v735
        %v738 = vpack.c.bf16 %v737, %v737
        %v739 = vld [vmem:[%s7] sm:$0xff]
        %v740 = vld [vmem:[%s7 + $0x8] sm:$0xff]
        %v741 = vld [vmem:[%s7 + $0x10] sm:$0xff]
        %v742 = vld [vmem:[%s7 + $0x18] sm:$0xff]
        %v743 = vld [vmem:[%s7 + $0x20] sm:$0xff]
        %v744 = vld [vmem:[%s7 + $0x28] sm:$0xff]
        %v745 = vld [vmem:[%s7 + $0x30] sm:$0xff]
        %v746 = vld [vmem:[%s7 + $0x38] sm:$0xff]
        %v747 = vld [vmem:[%s8] sm:$0xf]
        %v749 = vlaneseq
        %v750 = vshrl.u32 %v749, 7
        %v751 = vsub.s32 0, %v750
        %v752 = vrot.slane %v747, %v751
        %v753 = vlaneseq
        %v754 = vshrl.u32 %v753, 7
        %v755 = vsub.s32 1, %v754
        %v756 = vrot.slane %v747, %v755
        %v757 = vlaneseq
        %v758 = vshrl.u32 %v757, 7
        %v759 = vsub.s32 2, %v758
        %v760 = vrot.slane %v747, %v759
        %v761 = vlaneseq
        %v762 = vshrl.u32 %v761, 7
        %v763 = vsub.s32 3, %v762
        %v764 = vrot.slane %v747, %v763
        %v777 = vunpack.c.l.b16 %v739
        %v778 = vunpack.c.h.b16 %v739
        %v779 = vunpack.c.l.b16 %v740
        %v780 = vunpack.c.h.b16 %v740
        %v781 = vunpack.c.l.b16 %v741
        %v782 = vunpack.c.h.b16 %v741
        %v783 = vunpack.c.l.b16 %v742
        %v784 = vunpack.c.h.b16 %v742
        %v785 = vunpack.c.l.b16 %v743
        %v786 = vunpack.c.h.b16 %v743
        %v787 = vunpack.c.l.b16 %v744
        %v788 = vunpack.c.h.b16 %v744
        %v789 = vunpack.c.l.b16 %v745
        %v790 = vunpack.c.h.b16 %v745
        %v791 = vunpack.c.l.b16 %v746
        %v792 = vunpack.c.h.b16 %v746
        %v793 = vpack.c.b16 %v781, %v777
        %v794 = vpack.c.b16 %v782, %v778
        %v795 = vpack.c.b16 %v783, %v779
        %v796 = vpack.c.b16 %v784, %v780
        %v797 = vpack.c.b16 %v789, %v785
        %v798 = vpack.c.b16 %v790, %v786
        %v799 = vpack.c.b16 %v791, %v787
        %v800 = vpack.c.b16 %v792, %v788
        %v810 = vsel %vm462, %v738, 0
        %812 = vmatprep.subr.bf16.mxu0 %v794
        %813 = vmatpush1.bf16.msra.mxu0 %v793
        %814 = vmatprep.subr.bf16.mxu0 %v798
        %815 = vmatpush1.bf16.msra.mxu0 %v797
        %816 = vmatprep.subr.bf16.mxu0 0
        %817 = vmatpush1.bf16.msra.mxu0 0
        %818 = vmatprep.subr.bf16.mxu0 0
        %819 = vmatpush1.bf16.msra.mxu0 0
        %820 = vmatprep.subr.bf16.mxu0 0
        %821 = vmatpush1.bf16.msra.mxu0 0
        %822 = vmatprep.subr.bf16.mxu0 0
        %823 = vmatpush1.bf16.msra.mxu0 0
        %824 = vmatprep.subr.bf16.mxu0 0
        %825 = vmatpush1.bf16.msra.mxu0 0
        %826 = vmatprep.subr.bf16.mxu0 0
        %827 = vmatpush1.bf16.msra.mxu0 0
        %828 = vmatprep.subr.bf16.mxu0 0
        %829 = vmatpush1.bf16.msra.mxu0 0
        %830 = vmatprep.subr.bf16.mxu0 0
        %831 = vmatpush1.bf16.msra.mxu0 0
        %832 = vmatprep.subr.bf16.mxu0 0
        %833 = vmatpush1.bf16.msra.mxu0 0
        %834 = vmatprep.subr.bf16.mxu0 0
        %835 = vmatpush1.bf16.msra.mxu0 0
        %836 = vmatprep.subr.bf16.mxu0 0
        %837 = vmatpush1.bf16.msra.mxu0 0
        %838 = vmatprep.subr.bf16.mxu0 0
        %839 = vmatpush1.bf16.msra.mxu0 0
        %840 = vmatprep.subr.bf16.mxu0 0
        %841 = vmatpush1.bf16.msra.mxu0 0
        %842 = vmatprep.subr.bf16.mxu0 0
        %843 = vmatpush1.bf16.msra.mxu0 0
        %844 = vmatprep.mubr.bf16.mxu0 0
        %845 = vmatmul.mubr.bf16.gmra.mrb[0].mxu0 %v810
        %v846 = vpop.f32.mrb[0].mxu0
        %v847 = vadd.f32 %v752, %v846
        %v848 = vpop.f32.mrb[0].mxu0
        %v849 = vadd.f32 %v756, %v848
        %v850 = vpop.f32.mrb[0].mxu0
        %v851 = vpop.f32.mrb[0].mxu0
        %852 = vdwg.mxu0
        %853 = vmatprep.subr.bf16.mxu0 %v796
        %854 = vmatpush1.bf16.msra.mxu0 %v795
        %855 = vmatprep.subr.bf16.mxu0 %v800
        %856 = vmatpush1.bf16.msra.mxu0 %v799
        %857 = vmatprep.subr.bf16.mxu0 0
        %858 = vmatpush1.bf16.msra.mxu0 0
        %859 = vmatprep.subr.bf16.mxu0 0
        %860 = vmatpush1.bf16.msra.mxu0 0
        %861 = vmatprep.subr.bf16.mxu0 0
        %862 = vmatpush1.bf16.msra.mxu0 0
        %863 = vmatprep.subr.bf16.mxu0 0
        %864 = vmatpush1.bf16.msra.mxu0 0
        %865 = vmatprep.subr.bf16.mxu0 0
        %866 = vmatpush1.bf16.msra.mxu0 0
        %867 = vmatprep.subr.bf16.mxu0 0
        %868 = vmatpush1.bf16.msra.mxu0 0
        %869 = vmatprep.subr.bf16.mxu0 0
        %870 = vmatpush1.bf16.msra.mxu0 0
        %871 = vmatprep.subr.bf16.mxu0 0
        %872 = vmatpush1.bf16.msra.mxu0 0
        %873 = vmatprep.subr.bf16.mxu0 0
        %874 = vmatpush1.bf16.msra.mxu0 0
        %875 = vmatprep.subr.bf16.mxu0 0
        %876 = vmatpush1.bf16.msra.mxu0 0
        %877 = vmatprep.subr.bf16.mxu0 0
        %878 = vmatpush1.bf16.msra.mxu0 0
        %879 = vmatprep.subr.bf16.mxu0 0
        %880 = vmatpush1.bf16.msra.mxu0 0
        %881 = vmatprep.subr.bf16.mxu0 0
        %882 = vmatpush1.bf16.msra.mxu0 0
        %883 = vmatprep.subr.bf16.mxu0 0
        %884 = vmatpush1.bf16.msra.mxu0 0
        %885 = vmatprep.mubr.bf16.mxu0 0
        %886 = vmatmul.mubr.bf16.gmra.mrb[0].mxu0 %v810
        %v887 = vpop.f32.mrb[0].mxu0
        %v888 = vadd.f32 %v760, %v887
        %v889 = vpop.f32.mrb[0].mxu0
        %v890 = vadd.f32 %v764, %v889
        %v891 = vpop.f32.mrb[0].mxu0
        %v892 = vpop.f32.mrb[0].mxu0
        %893 = vdwg.mxu0
        %v894 = vmax.f32 %v847, 0.0
        %v895 = vmax.f32 %v849, 0.0
        %v896 = vmax.f32 %v888, 0.0
        %v897 = vmax.f32 %v890, 0.0
        %v898 = vpack.c.bf16 %v894, %v894
        %v899 = vpack.c.bf16 %v895, %v895
        %v900 = vpack.c.bf16 %v896, %v896
        %v901 = vpack.c.bf16 %v897, %v897
        %v902 = vld [vmem:[%s9] sm:$0xf]
        %v903 = vld [vmem:[%s9 + $0x4] sm:$0xf]
        %v904 = vld [vmem:[%s9 + $0x8] sm:$0xf]
        %v905 = vld [vmem:[%s9 + $0xc] sm:$0xf]
        %v906 = vld [vmem:[%s9 + $0x10] sm:$0xf]
        %v907 = vld [vmem:[%s9 + $0x14] sm:$0xf]
        %v908 = vld [vmem:[%s9 + $0x18] sm:$0xf]
        %v909 = vld [vmem:[%s9 + $0x1c] sm:$0xf]
        %v910 = vld [vmem:[%s9 + $0x20] sm:$0xf]
        %v911 = vld [vmem:[%s9 + $0x24] sm:$0xf]
        %v912 = vld [vmem:[%s9 + $0x28] sm:$0xf]
        %v913 = vld [vmem:[%s9 + $0x2c] sm:$0xf]
        %v914 = vld [vmem:[%s9 + $0x30] sm:$0xf]
        %v915 = vld [vmem:[%s9 + $0x34] sm:$0xf]
        %v916 = vld [vmem:[%s9 + $0x38] sm:$0xf]
        %v917 = vld [vmem:[%s9 + $0x3c] sm:$0xf]
        %v918 = vld [vmem:[%s9 + $0x40] sm:$0xf]
        %v919 = vld [vmem:[%s9 + $0x44] sm:$0xf]
        %v920 = vld [vmem:[%s9 + $0x48] sm:$0xf]
        %v921 = vld [vmem:[%s9 + $0x4c] sm:$0xf]
        %v922 = vld [vmem:[%s9 + $0x50] sm:$0xf]
        %v923 = vld [vmem:[%s9 + $0x54] sm:$0xf]
        %v924 = vld [vmem:[%s9 + $0x58] sm:$0xf]
        %v925 = vld [vmem:[%s9 + $0x5c] sm:$0xf]
        %v926 = vld [vmem:[%s9 + $0x60] sm:$0xf]
        %v927 = vld [vmem:[%s9 + $0x64] sm:$0xf]
        %v928 = vld [vmem:[%s9 + $0x68] sm:$0xf]
        %v929 = vld [vmem:[%s9 + $0x6c] sm:$0xf]
        %v930 = vld [vmem:[%s9 + $0x70] sm:$0xf]
        %v931 = vld [vmem:[%s9 + $0x74] sm:$0xf]
        %v932 = vld [vmem:[%s9 + $0x78] sm:$0xf]
        %v933 = vld [vmem:[%s9 + $0x7c] sm:$0xf]
        %v934 = vld [vmem:[%s9 + $0x80] sm:$0xf]
        %v935 = vld [vmem:[%s9 + $0x84] sm:$0xf]
        %v936 = vld [vmem:[%s9 + $0x88] sm:$0xf]
        %v937 = vld [vmem:[%s9 + $0x8c] sm:$0xf]
        %v938 = vld [vmem:[%s9 + $0x90] sm:$0xf]
        %v939 = vld [vmem:[%s9 + $0x94] sm:$0xf]
        %v940 = vld [vmem:[%s9 + $0x98] sm:$0xf]
        %v941 = vld [vmem:[%s9 + $0x9c] sm:$0xf]
        %v942 = vld [vmem:[%s9 + $0xa0] sm:$0xf]
        %v943 = vld [vmem:[%s9 + $0xa4] sm:$0xf]
        %v944 = vld [vmem:[%s9 + $0xa8] sm:$0xf]
        %v945 = vld [vmem:[%s9 + $0xac] sm:$0xf]
        %v946 = vld [vmem:[%s9 + $0xb0] sm:$0xf]
        %v947 = vld [vmem:[%s9 + $0xb4] sm:$0xf]
        %v948 = vld [vmem:[%s9 + $0xb8] sm:$0xf]
        %v949 = vld [vmem:[%s9 + $0xbc] sm:$0xf]
        %v950 = vld [vmem:[%s9 + $0xc0] sm:$0xf]
        %v951 = vld [vmem:[%s9 + $0xc4] sm:$0xf]
        %v952 = vld [vmem:[%s9 + $0xc8] sm:$0xf]
        %v953 = vld [vmem:[%s9 + $0xcc] sm:$0xf]
        %v954 = vld [vmem:[%s9 + $0xd0] sm:$0xf]
        %v955 = vld [vmem:[%s9 + $0xd4] sm:$0xf]
        %v956 = vld [vmem:[%s9 + $0xd8] sm:$0xf]
        %v957 = vld [vmem:[%s9 + $0xdc] sm:$0xf]
        %v958 = vld [vmem:[%s9 + $0xe0] sm:$0xf]
        %v959 = vld [vmem:[%s9 + $0xe4] sm:$0xf]
        %v960 = vld [vmem:[%s9 + $0xe8] sm:$0xf]
        %v961 = vld [vmem:[%s9 + $0xec] sm:$0xf]
        %v962 = vld [vmem:[%s9 + $0xf0] sm:$0xf]
        %v963 = vld [vmem:[%s9 + $0xf4] sm:$0xf]
        %v964 = vld [vmem:[%s9 + $0xf8] sm:$0xf]
        %v965 = vld [vmem:[%s9 + $0xfc] sm:$0xf]
        %v966 = vld [vmem:[%s10] sm:$0x1]
        %v968 = vlaneseq
        %v969 = vshrl.u32 %v968, 7
        %v970 = vsub.s32 0, %v969
        %v971 = vrot.slane %v966, %v970
        %v1037 = vunpack.c.l.b16 %v902
        %v1038 = vunpack.c.l.b16 %v903
        %v1039 = vunpack.c.l.b16 %v904
        %v1040 = vunpack.c.l.b16 %v905
        %v1041 = vunpack.c.l.b16 %v906
        %v1042 = vunpack.c.l.b16 %v907
        %v1043 = vunpack.c.l.b16 %v908
        %v1044 = vunpack.c.l.b16 %v909
        %v1045 = vunpack.c.l.b16 %v910
        %v1046 = vunpack.c.l.b16 %v911
        %v1047 = vunpack.c.l.b16 %v912
        %v1048 = vunpack.c.l.b16 %v913
        %v1049 = vunpack.c.l.b16 %v914
        %v1050 = vunpack.c.l.b16 %v915
        %v1051 = vunpack.c.l.b16 %v916
        %v1052 = vunpack.c.l.b16 %v917
        %v1053 = vunpack.c.l.b16 %v918
        %v1054 = vunpack.c.l.b16 %v919
        %v1055 = vunpack.c.l.b16 %v920
        %v1056 = vunpack.c.l.b16 %v921
        %v1057 = vunpack.c.l.b16 %v922
        %v1058 = vunpack.c.l.b16 %v923
        %v1059 = vunpack.c.l.b16 %v924
        %v1060 = vunpack.c.l.b16 %v925
        %v1061 = vunpack.c.l.b16 %v926
        %v1062 = vunpack.c.l.b16 %v927
        %v1063 = vunpack.c.l.b16 %v928
        %v1064 = vunpack.c.l.b16 %v929
        %v1065 = vunpack.c.l.b16 %v930
        %v1066 = vunpack.c.l.b16 %v931
        %v1067 = vunpack.c.l.b16 %v932
        %v1068 = vunpack.c.l.b16 %v933
        %v1069 = vunpack.c.l.b16 %v934
        %v1070 = vunpack.c.l.b16 %v935
        %v1071 = vunpack.c.l.b16 %v936
        %v1072 = vunpack.c.l.b16 %v937
        %v1073 = vunpack.c.l.b16 %v938
        %v1074 = vunpack.c.l.b16 %v939
        %v1075 = vunpack.c.l.b16 %v940
        %v1076 = vunpack.c.l.b16 %v941
        %v1077 = vunpack.c.l.b16 %v942
        %v1078 = vunpack.c.l.b16 %v943
        %v1079 = vunpack.c.l.b16 %v944
        %v1080 = vunpack.c.l.b16 %v945
        %v1081 = vunpack.c.l.b16 %v946
        %v1082 = vunpack.c.l.b16 %v947
        %v1083 = vunpack.c.l.b16 %v948
        %v1084 = vunpack.c.l.b16 %v949
        %v1085 = vunpack.c.l.b16 %v950
        %v1086 = vunpack.c.l.b16 %v951
        %v1087 = vunpack.c.l.b16 %v952
        %v1088 = vunpack.c.l.b16 %v953
        %v1089 = vunpack.c.l.b16 %v954
        %v1090 = vunpack.c.l.b16 %v955
        %v1091 = vunpack.c.l.b16 %v956
        %v1092 = vunpack.c.l.b16 %v957
        %v1093 = vunpack.c.l.b16 %v958
        %v1094 = vunpack.c.l.b16 %v959
        %v1095 = vunpack.c.l.b16 %v960
        %v1096 = vunpack.c.l.b16 %v961
        %v1097 = vunpack.c.l.b16 %v962
        %v1098 = vunpack.c.l.b16 %v963
        %v1099 = vunpack.c.l.b16 %v964
        %v1100 = vunpack.c.l.b16 %v965
        %v1101 = vpack.c.b16 %v1038, %v1037
        %v1102 = vpack.c.b16 %v1040, %v1039
        %v1103 = vpack.c.b16 %v1042, %v1041
        %v1104 = vpack.c.b16 %v1044, %v1043
        %v1105 = vpack.c.b16 %v1046, %v1045
        %v1106 = vpack.c.b16 %v1048, %v1047
        %v1107 = vpack.c.b16 %v1050, %v1049
        %v1108 = vpack.c.b16 %v1052, %v1051
        %v1109 = vpack.c.b16 %v1054, %v1053
        %v1110 = vpack.c.b16 %v1056, %v1055
        %v1111 = vpack.c.b16 %v1058, %v1057
        %v1112 = vpack.c.b16 %v1060, %v1059
        %v1113 = vpack.c.b16 %v1062, %v1061
        %v1114 = vpack.c.b16 %v1064, %v1063
        %v1115 = vpack.c.b16 %v1066, %v1065
        %v1116 = vpack.c.b16 %v1068, %v1067
        %v1117 = vpack.c.b16 %v1070, %v1069
        %v1118 = vpack.c.b16 %v1072, %v1071
        %v1119 = vpack.c.b16 %v1074, %v1073
        %v1120 = vpack.c.b16 %v1076, %v1075
        %v1121 = vpack.c.b16 %v1078, %v1077
        %v1122 = vpack.c.b16 %v1080, %v1079
        %v1123 = vpack.c.b16 %v1082, %v1081
        %v1124 = vpack.c.b16 %v1084, %v1083
        %v1125 = vpack.c.b16 %v1086, %v1085
        %v1126 = vpack.c.b16 %v1088, %v1087
        %v1127 = vpack.c.b16 %v1090, %v1089
        %v1128 = vpack.c.b16 %v1092, %v1091
        %v1129 = vpack.c.b16 %v1094, %v1093
        %v1130 = vpack.c.b16 %v1096, %v1095
        %v1131 = vpack.c.b16 %v1098, %v1097
        %v1132 = vpack.c.b16 %v1100, %v1099
        %1165 = vmatprep.subr.bf16.mxu0 0
        %1166 = vmatpush1.bf16.msra.mxu0 %v1101
        %1167 = vmatprep.subr.bf16.mxu0 0
        %1168 = vmatpush1.bf16.msra.mxu0 %v1102
        %1169 = vmatprep.subr.bf16.mxu0 0
        %1170 = vmatpush1.bf16.msra.mxu0 %v1103
        %1171 = vmatprep.subr.bf16.mxu0 0
        %1172 = vmatpush1.bf16.msra.mxu0 %v1104
        %1173 = vmatprep.subr.bf16.mxu0 0
        %1174 = vmatpush1.bf16.msra.mxu0 %v1105
        %1175 = vmatprep.subr.bf16.mxu0 0
        %1176 = vmatpush1.bf16.msra.mxu0 %v1106
        %1177 = vmatprep.subr.bf16.mxu0 0
        %1178 = vmatpush1.bf16.msra.mxu0 %v1107
        %1179 = vmatprep.subr.bf16.mxu0 0
        %1180 = vmatpush1.bf16.msra.mxu0 %v1108
        %1181 = vmatprep.subr.bf16.mxu0 0
        %1182 = vmatpush1.bf16.msra.mxu0 %v1109
        %1183 = vmatprep.subr.bf16.mxu0 0
        %1184 = vmatpush1.bf16.msra.mxu0 %v1110
        %1185 = vmatprep.subr.bf16.mxu0 0
        %1186 = vmatpush1.bf16.msra.mxu0 %v1111
        %1187 = vmatprep.subr.bf16.mxu0 0
        %1188 = vmatpush1.bf16.msra.mxu0 %v1112
        %1189 = vmatprep.subr.bf16.mxu0 0
        %1190 = vmatpush1.bf16.msra.mxu0 %v1113
        %1191 = vmatprep.subr.bf16.mxu0 0
        %1192 = vmatpush1.bf16.msra.mxu0 %v1114
        %1193 = vmatprep.subr.bf16.mxu0 0
        %1194 = vmatpush1.bf16.msra.mxu0 %v1115
        %1195 = vmatprep.subr.bf16.mxu0 0
        %1196 = vmatpush1.bf16.msra.mxu0 %v1116
        %1197 = vmatprep.mubr.bf16.mxu0 %v899
        %1198 = vmatmul.mubr.bf16.gmra.mrb[0].mxu0 %v898
        %v1199 = vpop.f32.mrb[0].mxu0
        %v1200 = vadd.f32 %v971, %v1199
        %v1201 = vpop.f32.mrb[0].mxu0
        %v1202 = vpop.f32.mrb[0].mxu0
        %v1203 = vpop.f32.mrb[0].mxu0
        %1204 = vdwg.mxu0
        %1205 = vmatprep.subr.bf16.mxu0 0
        %1206 = vmatpush1.bf16.msra.mxu0 %v1117
        %1207 = vmatprep.subr.bf16.mxu0 0
        %1208 = vmatpush1.bf16.msra.mxu0 %v1118
        %1209 = vmatprep.subr.bf16.mxu0 0
        %1210 = vmatpush1.bf16.msra.mxu0 %v1119
        %1211 = vmatprep.subr.bf16.mxu0 0
        %1212 = vmatpush1.bf16.msra.mxu0 %v1120
        %1213 = vmatprep.subr.bf16.mxu0 0
        %1214 = vmatpush1.bf16.msra.mxu0 %v1121
        %1215 = vmatprep.subr.bf16.mxu0 0
        %1216 = vmatpush1.bf16.msra.mxu0 %v1122
        %1217 = vmatprep.subr.bf16.mxu0 0
        %1218 = vmatpush1.bf16.msra.mxu0 %v1123
        %1219 = vmatprep.subr.bf16.mxu0 0
        %1220 = vmatpush1.bf16.msra.mxu0 %v1124
        %1221 = vmatprep.subr.bf16.mxu0 0
        %1222 = vmatpush1.bf16.msra.mxu0 %v1125
        %1223 = vmatprep.subr.bf16.mxu0 0
        %1224 = vmatpush1.bf16.msra.mxu0 %v1126
        %1225 = vmatprep.subr.bf16.mxu0 0
        %1226 = vmatpush1.bf16.msra.mxu0 %v1127
        %1227 = vmatprep.subr.bf16.mxu0 0
        %1228 = vmatpush1.bf16.msra.mxu0 %v1128
        %1229 = vmatprep.subr.bf16.mxu0 0
        %1230 = vmatpush1.bf16.msra.mxu0 %v1129
        %1231 = vmatprep.subr.bf16.mxu0 0
        %1232 = vmatpush1.bf16.msra.mxu0 %v1130
        %1233 = vmatprep.subr.bf16.mxu0 0
        %1234 = vmatpush1.bf16.msra.mxu0 %v1131
        %1235 = vmatprep.subr.bf16.mxu0 0
        %1236 = vmatpush1.bf16.msra.mxu0 %v1132
        %1237 = vmatprep.mubr.bf16.mxu0 %v901
        %1238 = vmatmul.mubr.bf16.gmra.mrb[0].mxu0 %v900
        %v1239 = vpop.f32.mrb[0].mxu0
        %v1240 = vadd.f32 %v1200, %v1239
        %v1241 = vpop.f32.mrb[0].mxu0
        %v1242 = vpop.f32.mrb[0].mxu0
        %v1243 = vpop.f32.mrb[0].mxu0
        %1244 = vdwg.mxu0
        %v1245 = vadd.f32 %v737, %v1240
        %v1246 = vld [vmem:[%s11] sm:$0x1]
        %v1247 = vld [vmem:[%s12] sm:$0x1]
        %v1248 = vsel %vm462, %v1245, 0.0
        %1249 = vadd.xlane.f32.xlu0 %v1248
        %v1250 = vpop.xlane.xlu0 %1249
        %v1251 = vmul.f32 %v1250, %v713
        %v1252 = vsub.f32 %v1245, %v1251
        %v1253 = vmul.f32 %v1252, %v1252
        %v1254 = vsel %vm462, %v1253, 0.0
        %1255 = vadd.xlane.f32.xlu0 %v1254
        %v1256 = vpop.xlane.xlu0 %1255
        %v1257 = vmul.f32 %v1256, %v713
        %v1258 = vadd.f32 %v1257, 1e-05
        %v1259 = vrsqrt.pop %v1258
        %v1260 = vmul.f32 %v1252, %v1259
        %v1262 = vlaneseq
        %v1263 = vshrl.u32 %v1262, 7
        %v1264 = vsub.s32 0, %v1263
        %v1265 = vrot.slane %v1246, %v1264
        %v1267 = vmul.f32 %v1260, %v1265
        %v1269 = vlaneseq
        %v1270 = vshrl.u32 %v1269, 7
        %v1271 = vsub.s32 0, %v1270
        %v1272 = vrot.slane %v1247, %v1271
        %v1274 = vadd.f32 %v1267, %v1272
        %1275 = vst.msk [vmem:[%s431] sm:$0xff] %vm462, %v1274
        %s1276 = sand.u32 %s313, 1
        %s1277 = scalar_lea.sflag [#allocation3], %s1276
        %s1278 = sand.u32 %s313, 1
        %s1279 = smul.addr %s1278, 8
        %s1280 = scalar_lea.vmem [#allocation2], %s1279
        // Predicated region
        $region73: #{tpu_custom_call.1} parent=71 // pred_check
          %p1281 = pneg %p323
        $region74: #{tpu_custom_call.1} parent=71 // pred_check_branch
          %1283 = sbr.rel (%p1281) target = $region76
        $region75: #{tpu_custom_call.1} parent=71 // pred_region
          %s1285 = ssub.s32 128, 128
          %1286 = vsyncadd %s1277, %s1285
          %s1287 = smul.addr %s27, 128
          %s1288 = scalar_lea.hbm %s13, %s1287
          %s1290 = sshll.u32 %s1280, 4
          %s1291 = int_to_ptr.vmem [resolvable:$true] %s1290
          %1293 = dma.vmem_to_hbm [thread:$0]  %s1291, 128, %s1288, %s1277
        $region76: #{tpu_custom_call.1} parent=71 // pred_fallthru
          _
      $region72: #{tpu_custom_call.1} parent=5 // pred_fallthru
        _
      %p1294 = scmp.le.s32.totalorder 2, %s22
      // Predicated region
      $region77: #{tpu_custom_call.1} parent=5 // pred_check
        %p1295 = pneg %p1294
      $region78: #{tpu_custom_call.1} parent=5 // pred_check_branch
        %1297 = sbr.rel (%p1295) target = $region80
      $region79: #{tpu_custom_call.1} parent=5 // pred_region
        %s1298 = ssub.s32 %s22, 2
        // Predicated region
        $region81: #{tpu_custom_call.1} parent=79 // pred_check
          %p1299 = pneg %p329
        $region82: #{tpu_custom_call.1} parent=79 // pred_check_branch
          %1301 = sbr.rel (%p1299) target = $region84
        $region83: #{tpu_custom_call.1} parent=79 // pred_region
          %s1302 = sand.u32 %s314, 1
          %s1303 = scalar_lea.sflag [#allocation3], %s1302
          %s1304 = sand.u32 %s314, 1
          %s1305 = smul.addr %s1304, 8
          %s1306 = scalar_lea.vmem [#allocation2], %s1305
          %1307 = dma.done %s1303, 128
        $region84: #{tpu_custom_call.1} parent=79 // pred_fallthru
          _
      $region80: #{tpu_custom_call.1} parent=5 // pred_fallthru
        _
    $region6: #{tpu_custom_call.1} parent=1 // loop_footer
      %s26 = sadd.s32 1, %s22
    $region7: #{tpu_custom_call.1} parent=1 // loop_footer_branch
      %21 = sbr.rel target = $region3
    $region8: #{tpu_custom_call.1} parent=1 // loop_exit
      _
    %1308 = vsyncpa [#allocation3], 1
    %s1309 = scalar_lea.sflag [#allocation3], 1
    %1310 = vsyncpa %s1309, 1

</llo_original>
